<compile_context>
chip_gen: v7x
topology: tpu7x:2x2x1
jax: 0.10.0
libtpu: 0.0.40
codegen_flags: <defaults>
</compile_context>

<pallas_src>
import functools

import jax
import jax.numpy as jnp
from jax.experimental import pallas as pl
from jax.experimental.pallas import tpu as pltpu


def _round_up(n, m):
    return (n + m - 1) // m * m


# (dy, dx) tap offsets in the same (ky, kx) order the weights are packed in.
_TAPS = tuple((ky - 1, kx - 1) for ky in range(3) for kx in range(3))


# ---------------------------------------------------------------------------
# In-kernel math helpers (values, not refs)
# ---------------------------------------------------------------------------
def _erf(x):
    # Abramowitz & Stegun 7.1.26 polynomial (max abs error ~1.5e-7).
    # TODO(synk): replace with lax.erf if/when erf_p gets a Pallas TPU lowering.
    a1, a2, a3, a4, a5 = (0.254829592, -0.284496736, 1.421413741,
                          -1.453152027, 1.061405429)
    p = 0.3275911
    s = jnp.where(x >= 0.0, 1.0, -1.0)
    z = jnp.abs(x)
    # EUP reciprocal (same slot as exp, which has slack) instead of a VALU div.
    t = pl.reciprocal(1.0 + p * z, approx=True)
    poly = ((((a5 * t + a4) * t + a3) * t + a2) * t + a1) * t
    return s * (1.0 - poly * jnp.exp(-z * z))


def _gelu_exact(x):
    # torch.nn.GELU() default (approximate='none'): x * Phi(x)
    return 0.5 * x * (1.0 + _erf(x * 0.7071067811865476))


# ---------------------------------------------------------------------------
# Fused kernel: conv -> gelu -> conv -> gelu -> conv -> gelu -> conv -> 0.5*tanh
# One batch element per grid step; everything stays in vregs between layers.
# ---------------------------------------------------------------------------
def lrp_kernel(x_ref, w1, b1, w2, b2, w3, b3, w4, b4, o_ref, *, H, W, CP):
    HW = H * W

    # Border-validity masks for the 9 taps, computed once and shared by all
    # four conv layers.  Row/col indices are derived with float divide+floor
    # (exact for these small integers) to avoid integer div/rem lowering.
    lane = jax.lax.broadcasted_iota(jnp.int32, (CP, HW), 1).astype(jnp.float32)
    row = jnp.floor(lane / W)
    col = lane - row * W
    masks = []
    for dy, dx in _TAPS:
        masks.append((row + dy >= 0.0) & (row + dy <= H - 1.0) &
                     (col + dx >= 0.0) & (col + dx <= W - 1.0))

    def conv3x3(y, w_ref, b_ref):
        # y: (CP, HW) -> (CP, HW).  Build the im2col patch with lane rolls
        # (XLU) + border masks (VPU select), then a single MXU dot (K = 9*CP).
        taps = []
        for m, (dy, dx) in zip(masks, _TAPS):
            s = dy * W + dx                       # flat lane shift of this tap
            shifted = y if s == 0 else pltpu.roll(y, shift=(-s) % HW, axis=1)
            taps.append(jnp.where(m, shifted, 0.0))
        patch = jnp.concatenate(taps, axis=0)                  # (9*CP, HW)
        out = jnp.dot(w_ref[...], patch,
                      preferred_element_type=jnp.float32)      # (CP, HW)
        return out + b_ref[...]                                # (CP,1) bcast

    y = x_ref[0]                                               # (CP, HW)
    y = _gelu_exact(conv3x3(y, w1, b1))
    y = _gelu_exact(conv3x3(y, w2, b2))
    y = _gelu_exact(conv3x3(y, w3, b3))
    y = 0.5 * jnp.tanh(conv3x3(y, w4, b4))
    o_ref[0] = y.astype(o_ref.dtype)


# ---------------------------------------------------------------------------
# Wrapper: weight packing, channel padding, pallas_call setup (glue only)
# ---------------------------------------------------------------------------
def _pack_weight(w_hwio, bias, CP):
    """HWIO (3,3,Cin,Cout) -> (CP, 9*CP) matching the kernel's patch order."""
    cin, cout = int(w_hwio.shape[2]), int(w_hwio.shape[3])
    w = jnp.transpose(w_hwio, (3, 0, 1, 2))                    # (Cout,3,3,Cin)
    w = jnp.pad(w, ((0, CP - cout), (0, 0), (0, 0), (0, CP - cin)))
    w = w.reshape(CP, 9 * CP).astype(jnp.float32)              # cols: (ky,kx,ci)
    b = jnp.pad(jnp.reshape(bias, (-1,)).astype(jnp.float32), (0, CP - cout))
    return w, b.reshape(CP, 1)


def latent_residual_prediction(x_nchw, weights, biases):
    x = x_nchw.astype(jnp.float32)
    B, C0, H, W = x.shape
    HW = H * W
    chans = [C0] + [int(w.shape[-1]) for w in weights]
    c_out = chans[-1]
    CP = _round_up(max(chans), 8)            # channels padded to a sublane tile

    # NCHW -> (B, CP, H*W): lane-dense input (last dim 256), no transpose.
    xk = jnp.pad(x, ((0, 0), (0, CP - C0), (0, 0), (0, 0))).reshape(B, CP, HW)

    args = [xk]
    in_specs = [pl.BlockSpec((1, CP, HW), lambda b: (b, 0, 0))]
    for w, bias in zip(weights, biases):
        wp, bp = _pack_weight(w, bias, CP)
        args += [wp, bp]
        in_specs += [pl.BlockSpec((CP, 9 * CP), lambda b: (0, 0)),
                     pl.BlockSpec((CP, 1), lambda b: (0, 0))]

    kernel = functools.partial(lrp_kernel, H=H, W=W, CP=CP)
    out = pl.pallas_call(
        kernel,
        out_shape=jax.ShapeDtypeStruct((B, CP, HW), jnp.float32),
        grid_spec=pltpu.PrefetchScalarGridSpec(
            num_scalar_prefetch=0,
            grid=(B,),
            in_specs=in_specs,
            out_specs=pl.BlockSpec((1, CP, HW), lambda b: (b, 0, 0)),
        ),
        compiler_params=pltpu.CompilerParams(
            dimension_semantics=("parallel",)),
    )(*args)

    # (B, CP, H*W) -> NCHW, dropping the channel padding.
    return out[:, :c_out, :].reshape(B, c_out, H, W)


# ---------------------------------------------------------------------------
# Deterministic parameter construction + reference check + smoke run
# ---------------------------------------------------------------------------
if __name__ == "__main__":
    in_dim, out_dim = 8, 4
    B, H, W = 2, 16, 16

    diff = abs(out_dim - in_dim)
    chans = [in_dim,
             in_dim - diff // 4,
             in_dim - diff // 2,
             in_dim - diff * 3 // 4,
             out_dim]                                  # [8, 7, 6, 5, 4]

    key = jax.random.PRNGKey(0)
    keys = jax.random.split(key, 1 + 2 * 4)

    weights, biases = [], []
    for i in range(4):
        cin, cout = chans[i], chans[i + 1]
        bound = 1.0 / (cin * 9) ** 0.5                 # PyTorch-style uniform init
        weights.append(jax.random.uniform(
            keys[1 + 2 * i], (3, 3, cin, cout), jnp.float32, -bound, bound))
        biases.append(jax.random.uniform(
            keys[2 + 2 * i], (1, cout), jnp.float32, -bound, bound))

    x = jax.random.normal(keys[0], (B, in_dim, H, W), jnp.float32)  # NCHW

    y = latent_residual_prediction(x, weights, biases)
    y = jax.block_until_ready(y)

    # Pure-JAX reference (exact erf GELU); loose tolerance covers the A&S erf
    # polynomial and the approximate EUP reciprocal inside the kernel.
    def _ref(xr):
        yr = xr
        for idx, (w, b) in enumerate(zip(weights, biases)):
            yr = jax.lax.conv_general_dilated(
                yr, w, window_strides=(1, 1), padding=((1, 1), (1, 1)),
                dimension_numbers=("NCHW", "HWIO", "NCHW"))
            yr = yr + b.reshape(1, -1, 1, 1)
            if idx < 3:
                yr = jax.nn.gelu(yr, approximate=False)
        return 0.5 * jnp.tanh(yr)

    y_ref = _ref(x)
    err = float(jnp.max(jnp.abs(y - y_ref)))

    assert y.shape == (B, out_dim, H, W)
    assert bool(jnp.all(jnp.isfinite(y)))
    assert bool(jnp.max(jnp.abs(y)) <= 0.5)            # 0.5 * tanh bound
    assert err < 3e-2, f"max abs err vs reference: {err}"
    print("KERNEL_OK")
</pallas_src>

<mosaic_0001>
module attributes {stable_mosaic.version = 11 : i64} {
  func.func @lrp_kernel(%arg0: i32, %arg1: memref<1x8x256xf32, #tpu.memory_space<vmem>>, %arg2: memref<8x72xf32, #tpu.memory_space<vmem>>, %arg3: memref<8x1xf32, #tpu.memory_space<vmem>>, %arg4: memref<8x72xf32, #tpu.memory_space<vmem>>, %arg5: memref<8x1xf32, #tpu.memory_space<vmem>>, %arg6: memref<8x72xf32, #tpu.memory_space<vmem>>, %arg7: memref<8x1xf32, #tpu.memory_space<vmem>>, %arg8: memref<8x72xf32, #tpu.memory_space<vmem>>, %arg9: memref<8x1xf32, #tpu.memory_space<vmem>>, %arg10: memref<1x8x256xf32, #tpu.memory_space<vmem>>) attributes {dimension_semantics = [#tpu.dimension_semantics<parallel>], iteration_bounds = array<i64: 2>, scalar_prefetch = 0 : i64, scratch_operands = 0 : i64, tpu.core_type = #tpu.core_type<tc>, window_params = [{transform_indices = @transform_0, window_bounds = array<i64: 1, 8, 256>}, {pipeline_mode = #tpu.pipeline_mode<synchronous>, transform_indices = @transform_1, window_bounds = array<i64: 8, 72>}, {pipeline_mode = #tpu.pipeline_mode<synchronous>, transform_indices = @transform_2, window_bounds = array<i64: 8, 1>}, {pipeline_mode = #tpu.pipeline_mode<synchronous>, transform_indices = @transform_3, window_bounds = array<i64: 8, 72>}, {pipeline_mode = #tpu.pipeline_mode<synchronous>, transform_indices = @transform_4, window_bounds = array<i64: 8, 1>}, {pipeline_mode = #tpu.pipeline_mode<synchronous>, transform_indices = @transform_5, window_bounds = array<i64: 8, 72>}, {pipeline_mode = #tpu.pipeline_mode<synchronous>, transform_indices = @transform_6, window_bounds = array<i64: 8, 1>}, {pipeline_mode = #tpu.pipeline_mode<synchronous>, transform_indices = @transform_7, window_bounds = array<i64: 8, 72>}, {pipeline_mode = #tpu.pipeline_mode<synchronous>, transform_indices = @transform_8, window_bounds = array<i64: 8, 1>}, {transform_indices = @transform_9, window_bounds = array<i64: 1, 8, 256>}]} {
    %0 = tpu.iota {dimensions = array<i32: 1>} : vector<8x256xi32>
    %1 = arith.sitofp %0 : vector<8x256xi32> to vector<8x256xf32>
    %cst = arith.constant 1.600000e+01 : f32
    %2 = vector.broadcast %cst : f32 to vector<8x256xf32>
    %3 = arith.divf %1, %2 : vector<8x256xf32>
    %4 = math.floor %3 : vector<8x256xf32>
    %cst_0 = arith.constant 1.600000e+01 : f32
    %5 = vector.broadcast %cst_0 : f32 to vector<8x256xf32>
    %6 = arith.mulf %4, %5 : vector<8x256xf32>
    %7 = arith.subf %1, %6 : vector<8x256xf32>
    %cst_1 = arith.constant -1.000000e+00 : f32
    %8 = vector.broadcast %cst_1 : f32 to vector<8x256xf32>
    %9 = arith.addf %4, %8 : vector<8x256xf32>
    %cst_2 = arith.constant 0.000000e+00 : f32
    %10 = vector.broadcast %cst_2 : f32 to vector<8x256xf32>
    %11 = arith.cmpf oge, %9, %10 : vector<8x256xf32>
    %cst_3 = arith.constant -1.000000e+00 : f32
    %12 = vector.broadcast %cst_3 : f32 to vector<8x256xf32>
    %13 = arith.addf %4, %12 : vector<8x256xf32>
    %cst_4 = arith.constant 1.500000e+01 : f32
    %14 = vector.broadcast %cst_4 : f32 to vector<8x256xf32>
    %15 = arith.cmpf ole, %13, %14 : vector<8x256xf32>
    %16 = arith.andi %11, %15 : vector<8x256xi1>
    %cst_5 = arith.constant -1.000000e+00 : f32
    %17 = vector.broadcast %cst_5 : f32 to vector<8x256xf32>
    %18 = arith.addf %7, %17 : vector<8x256xf32>
    %cst_6 = arith.constant 0.000000e+00 : f32
    %19 = vector.broadcast %cst_6 : f32 to vector<8x256xf32>
    %20 = arith.cmpf oge, %18, %19 : vector<8x256xf32>
    %21 = arith.andi %16, %20 : vector<8x256xi1>
    %cst_7 = arith.constant -1.000000e+00 : f32
    %22 = vector.broadcast %cst_7 : f32 to vector<8x256xf32>
    %23 = arith.addf %7, %22 : vector<8x256xf32>
    %cst_8 = arith.constant 1.500000e+01 : f32
    %24 = vector.broadcast %cst_8 : f32 to vector<8x256xf32>
    %25 = arith.cmpf ole, %23, %24 : vector<8x256xf32>
    %26 = arith.andi %21, %25 : vector<8x256xi1>
    %cst_9 = arith.constant -1.000000e+00 : f32
    %27 = vector.broadcast %cst_9 : f32 to vector<8x256xf32>
    %28 = arith.addf %4, %27 : vector<8x256xf32>
    %cst_10 = arith.constant 0.000000e+00 : f32
    %29 = vector.broadcast %cst_10 : f32 to vector<8x256xf32>
    %30 = arith.cmpf oge, %28, %29 : vector<8x256xf32>
    %cst_11 = arith.constant -1.000000e+00 : f32
    %31 = vector.broadcast %cst_11 : f32 to vector<8x256xf32>
    %32 = arith.addf %4, %31 : vector<8x256xf32>
    %cst_12 = arith.constant 1.500000e+01 : f32
    %33 = vector.broadcast %cst_12 : f32 to vector<8x256xf32>
    %34 = arith.cmpf ole, %32, %33 : vector<8x256xf32>
    %35 = arith.andi %30, %34 : vector<8x256xi1>
    %cst_13 = arith.constant 0.000000e+00 : f32
    %36 = vector.broadcast %cst_13 : f32 to vector<8x256xf32>
    %37 = arith.addf %7, %36 : vector<8x256xf32>
    %cst_14 = arith.constant 0.000000e+00 : f32
    %38 = vector.broadcast %cst_14 : f32 to vector<8x256xf32>
    %39 = arith.cmpf oge, %37, %38 : vector<8x256xf32>
    %40 = arith.andi %35, %39 : vector<8x256xi1>
    %cst_15 = arith.constant 0.000000e+00 : f32
    %41 = vector.broadcast %cst_15 : f32 to vector<8x256xf32>
    %42 = arith.addf %7, %41 : vector<8x256xf32>
    %cst_16 = arith.constant 1.500000e+01 : f32
    %43 = vector.broadcast %cst_16 : f32 to vector<8x256xf32>
    %44 = arith.cmpf ole, %42, %43 : vector<8x256xf32>
    %45 = arith.andi %40, %44 : vector<8x256xi1>
    %cst_17 = arith.constant -1.000000e+00 : f32
    %46 = vector.broadcast %cst_17 : f32 to vector<8x256xf32>
    %47 = arith.addf %4, %46 : vector<8x256xf32>
    %cst_18 = arith.constant 0.000000e+00 : f32
    %48 = vector.broadcast %cst_18 : f32 to vector<8x256xf32>
    %49 = arith.cmpf oge, %47, %48 : vector<8x256xf32>
    %cst_19 = arith.constant -1.000000e+00 : f32
    %50 = vector.broadcast %cst_19 : f32 to vector<8x256xf32>
    %51 = arith.addf %4, %50 : vector<8x256xf32>
    %cst_20 = arith.constant 1.500000e+01 : f32
    %52 = vector.broadcast %cst_20 : f32 to vector<8x256xf32>
    %53 = arith.cmpf ole, %51, %52 : vector<8x256xf32>
    %54 = arith.andi %49, %53 : vector<8x256xi1>
    %cst_21 = arith.constant 1.000000e+00 : f32
    %55 = vector.broadcast %cst_21 : f32 to vector<8x256xf32>
    %56 = arith.addf %7, %55 : vector<8x256xf32>
    %cst_22 = arith.constant 0.000000e+00 : f32
    %57 = vector.broadcast %cst_22 : f32 to vector<8x256xf32>
    %58 = arith.cmpf oge, %56, %57 : vector<8x256xf32>
    %59 = arith.andi %54, %58 : vector<8x256xi1>
    %cst_23 = arith.constant 1.000000e+00 : f32
    %60 = vector.broadcast %cst_23 : f32 to vector<8x256xf32>
    %61 = arith.addf %7, %60 : vector<8x256xf32>
    %cst_24 = arith.constant 1.500000e+01 : f32
    %62 = vector.broadcast %cst_24 : f32 to vector<8x256xf32>
    %63 = arith.cmpf ole, %61, %62 : vector<8x256xf32>
    %64 = arith.andi %59, %63 : vector<8x256xi1>
    %cst_25 = arith.constant 0.000000e+00 : f32
    %65 = vector.broadcast %cst_25 : f32 to vector<8x256xf32>
    %66 = arith.addf %4, %65 : vector<8x256xf32>
    %cst_26 = arith.constant 0.000000e+00 : f32
    %67 = vector.broadcast %cst_26 : f32 to vector<8x256xf32>
    %68 = arith.cmpf oge, %66, %67 : vector<8x256xf32>
    %cst_27 = arith.constant 0.000000e+00 : f32
    %69 = vector.broadcast %cst_27 : f32 to vector<8x256xf32>
    %70 = arith.addf %4, %69 : vector<8x256xf32>
    %cst_28 = arith.constant 1.500000e+01 : f32
    %71 = vector.broadcast %cst_28 : f32 to vector<8x256xf32>
    %72 = arith.cmpf ole, %70, %71 : vector<8x256xf32>
    %73 = arith.andi %68, %72 : vector<8x256xi1>
    %cst_29 = arith.constant -1.000000e+00 : f32
    %74 = vector.broadcast %cst_29 : f32 to vector<8x256xf32>
    %75 = arith.addf %7, %74 : vector<8x256xf32>
    %cst_30 = arith.constant 0.000000e+00 : f32
    %76 = vector.broadcast %cst_30 : f32 to vector<8x256xf32>
    %77 = arith.cmpf oge, %75, %76 : vector<8x256xf32>
    %78 = arith.andi %73, %77 : vector<8x256xi1>
    %cst_31 = arith.constant -1.000000e+00 : f32
    %79 = vector.broadcast %cst_31 : f32 to vector<8x256xf32>
    %80 = arith.addf %7, %79 : vector<8x256xf32>
    %cst_32 = arith.constant 1.500000e+01 : f32
    %81 = vector.broadcast %cst_32 : f32 to vector<8x256xf32>
    %82 = arith.cmpf ole, %80, %81 : vector<8x256xf32>
    %83 = arith.andi %78, %82 : vector<8x256xi1>
    %cst_33 = arith.constant 0.000000e+00 : f32
    %84 = vector.broadcast %cst_33 : f32 to vector<8x256xf32>
    %85 = arith.addf %4, %84 : vector<8x256xf32>
    %cst_34 = arith.constant 0.000000e+00 : f32
    %86 = vector.broadcast %cst_34 : f32 to vector<8x256xf32>
    %87 = arith.cmpf oge, %85, %86 : vector<8x256xf32>
    %cst_35 = arith.constant 0.000000e+00 : f32
    %88 = vector.broadcast %cst_35 : f32 to vector<8x256xf32>
    %89 = arith.addf %4, %88 : vector<8x256xf32>
    %cst_36 = arith.constant 1.500000e+01 : f32
    %90 = vector.broadcast %cst_36 : f32 to vector<8x256xf32>
    %91 = arith.cmpf ole, %89, %90 : vector<8x256xf32>
    %92 = arith.andi %87, %91 : vector<8x256xi1>
    %cst_37 = arith.constant 0.000000e+00 : f32
    %93 = vector.broadcast %cst_37 : f32 to vector<8x256xf32>
    %94 = arith.addf %7, %93 : vector<8x256xf32>
    %cst_38 = arith.constant 0.000000e+00 : f32
    %95 = vector.broadcast %cst_38 : f32 to vector<8x256xf32>
    %96 = arith.cmpf oge, %94, %95 : vector<8x256xf32>
    %97 = arith.andi %92, %96 : vector<8x256xi1>
    %cst_39 = arith.constant 0.000000e+00 : f32
    %98 = vector.broadcast %cst_39 : f32 to vector<8x256xf32>
    %99 = arith.addf %7, %98 : vector<8x256xf32>
    %cst_40 = arith.constant 1.500000e+01 : f32
    %100 = vector.broadcast %cst_40 : f32 to vector<8x256xf32>
    %101 = arith.cmpf ole, %99, %100 : vector<8x256xf32>
    %102 = arith.andi %97, %101 : vector<8x256xi1>
    %cst_41 = arith.constant 0.000000e+00 : f32
    %103 = vector.broadcast %cst_41 : f32 to vector<8x256xf32>
    %104 = arith.addf %4, %103 : vector<8x256xf32>
    %cst_42 = arith.constant 0.000000e+00 : f32
    %105 = vector.broadcast %cst_42 : f32 to vector<8x256xf32>
    %106 = arith.cmpf oge, %104, %105 : vector<8x256xf32>
    %cst_43 = arith.constant 0.000000e+00 : f32
    %107 = vector.broadcast %cst_43 : f32 to vector<8x256xf32>
    %108 = arith.addf %4, %107 : vector<8x256xf32>
    %cst_44 = arith.constant 1.500000e+01 : f32
    %109 = vector.broadcast %cst_44 : f32 to vector<8x256xf32>
    %110 = arith.cmpf ole, %108, %109 : vector<8x256xf32>
    %111 = arith.andi %106, %110 : vector<8x256xi1>
    %cst_45 = arith.constant 1.000000e+00 : f32
    %112 = vector.broadcast %cst_45 : f32 to vector<8x256xf32>
    %113 = arith.addf %7, %112 : vector<8x256xf32>
    %cst_46 = arith.constant 0.000000e+00 : f32
    %114 = vector.broadcast %cst_46 : f32 to vector<8x256xf32>
    %115 = arith.cmpf oge, %113, %114 : vector<8x256xf32>
    %116 = arith.andi %111, %115 : vector<8x256xi1>
    %cst_47 = arith.constant 1.000000e+00 : f32
    %117 = vector.broadcast %cst_47 : f32 to vector<8x256xf32>
    %118 = arith.addf %7, %117 : vector<8x256xf32>
    %cst_48 = arith.constant 1.500000e+01 : f32
    %119 = vector.broadcast %cst_48 : f32 to vector<8x256xf32>
    %120 = arith.cmpf ole, %118, %119 : vector<8x256xf32>
    %121 = arith.andi %116, %120 : vector<8x256xi1>
    %cst_49 = arith.constant 1.000000e+00 : f32
    %122 = vector.broadcast %cst_49 : f32 to vector<8x256xf32>
    %123 = arith.addf %4, %122 : vector<8x256xf32>
    %cst_50 = arith.constant 0.000000e+00 : f32
    %124 = vector.broadcast %cst_50 : f32 to vector<8x256xf32>
    %125 = arith.cmpf oge, %123, %124 : vector<8x256xf32>
    %cst_51 = arith.constant 1.000000e+00 : f32
    %126 = vector.broadcast %cst_51 : f32 to vector<8x256xf32>
    %127 = arith.addf %4, %126 : vector<8x256xf32>
    %cst_52 = arith.constant 1.500000e+01 : f32
    %128 = vector.broadcast %cst_52 : f32 to vector<8x256xf32>
    %129 = arith.cmpf ole, %127, %128 : vector<8x256xf32>
    %130 = arith.andi %125, %129 : vector<8x256xi1>
    %cst_53 = arith.constant -1.000000e+00 : f32
    %131 = vector.broadcast %cst_53 : f32 to vector<8x256xf32>
    %132 = arith.addf %7, %131 : vector<8x256xf32>
    %cst_54 = arith.constant 0.000000e+00 : f32
    %133 = vector.broadcast %cst_54 : f32 to vector<8x256xf32>
    %134 = arith.cmpf oge, %132, %133 : vector<8x256xf32>
    %135 = arith.andi %130, %134 : vector<8x256xi1>
    %cst_55 = arith.constant -1.000000e+00 : f32
    %136 = vector.broadcast %cst_55 : f32 to vector<8x256xf32>
    %137 = arith.addf %7, %136 : vector<8x256xf32>
    %cst_56 = arith.constant 1.500000e+01 : f32
    %138 = vector.broadcast %cst_56 : f32 to vector<8x256xf32>
    %139 = arith.cmpf ole, %137, %138 : vector<8x256xf32>
    %140 = arith.andi %135, %139 : vector<8x256xi1>
    %cst_57 = arith.constant 1.000000e+00 : f32
    %141 = vector.broadcast %cst_57 : f32 to vector<8x256xf32>
    %142 = arith.addf %4, %141 : vector<8x256xf32>
    %cst_58 = arith.constant 0.000000e+00 : f32
    %143 = vector.broadcast %cst_58 : f32 to vector<8x256xf32>
    %144 = arith.cmpf oge, %142, %143 : vector<8x256xf32>
    %cst_59 = arith.constant 1.000000e+00 : f32
    %145 = vector.broadcast %cst_59 : f32 to vector<8x256xf32>
    %146 = arith.addf %4, %145 : vector<8x256xf32>
    %cst_60 = arith.constant 1.500000e+01 : f32
    %147 = vector.broadcast %cst_60 : f32 to vector<8x256xf32>
    %148 = arith.cmpf ole, %146, %147 : vector<8x256xf32>
    %149 = arith.andi %144, %148 : vector<8x256xi1>
    %cst_61 = arith.constant 0.000000e+00 : f32
    %150 = vector.broadcast %cst_61 : f32 to vector<8x256xf32>
    %151 = arith.addf %7, %150 : vector<8x256xf32>
    %cst_62 = arith.constant 0.000000e+00 : f32
    %152 = vector.broadcast %cst_62 : f32 to vector<8x256xf32>
    %153 = arith.cmpf oge, %151, %152 : vector<8x256xf32>
    %154 = arith.andi %149, %153 : vector<8x256xi1>
    %cst_63 = arith.constant 0.000000e+00 : f32
    %155 = vector.broadcast %cst_63 : f32 to vector<8x256xf32>
    %156 = arith.addf %7, %155 : vector<8x256xf32>
    %cst_64 = arith.constant 1.500000e+01 : f32
    %157 = vector.broadcast %cst_64 : f32 to vector<8x256xf32>
    %158 = arith.cmpf ole, %156, %157 : vector<8x256xf32>
    %159 = arith.andi %154, %158 : vector<8x256xi1>
    %cst_65 = arith.constant 1.000000e+00 : f32
    %160 = vector.broadcast %cst_65 : f32 to vector<8x256xf32>
    %161 = arith.addf %4, %160 : vector<8x256xf32>
    %cst_66 = arith.constant 0.000000e+00 : f32
    %162 = vector.broadcast %cst_66 : f32 to vector<8x256xf32>
    %163 = arith.cmpf oge, %161, %162 : vector<8x256xf32>
    %cst_67 = arith.constant 1.000000e+00 : f32
    %164 = vector.broadcast %cst_67 : f32 to vector<8x256xf32>
    %165 = arith.addf %4, %164 : vector<8x256xf32>
    %cst_68 = arith.constant 1.500000e+01 : f32
    %166 = vector.broadcast %cst_68 : f32 to vector<8x256xf32>
    %167 = arith.cmpf ole, %165, %166 : vector<8x256xf32>
    %168 = arith.andi %163, %167 : vector<8x256xi1>
    %cst_69 = arith.constant 1.000000e+00 : f32
    %169 = vector.broadcast %cst_69 : f32 to vector<8x256xf32>
    %170 = arith.addf %7, %169 : vector<8x256xf32>
    %cst_70 = arith.constant 0.000000e+00 : f32
    %171 = vector.broadcast %cst_70 : f32 to vector<8x256xf32>
    %172 = arith.cmpf oge, %170, %171 : vector<8x256xf32>
    %173 = arith.andi %168, %172 : vector<8x256xi1>
    %cst_71 = arith.constant 1.000000e+00 : f32
    %174 = vector.broadcast %cst_71 : f32 to vector<8x256xf32>
    %175 = arith.addf %7, %174 : vector<8x256xf32>
    %cst_72 = arith.constant 1.500000e+01 : f32
    %176 = vector.broadcast %cst_72 : f32 to vector<8x256xf32>
    %177 = arith.cmpf ole, %175, %176 : vector<8x256xf32>
    %178 = arith.andi %173, %177 : vector<8x256xi1>
    %c0 = arith.constant 0 : index
    %c0_73 = arith.constant 0 : index
    %c0_74 = arith.constant 0 : index
    %179 = vector.load %arg1[%c0, %c0_73, %c0_74] : memref<1x8x256xf32, #tpu.memory_space<vmem>>, vector<1x8x256xf32>
    %180 = vector.shape_cast %179 : vector<1x8x256xf32> to vector<8x256xf32>
    %c17_i32 = arith.constant 17 : i32
    %181 = tpu.dynamic_rotate %180 by %c17_i32 dim 1 : vector<8x256xf32>, i32 -> vector<8x256xf32>
    %cst_75 = arith.constant 0.000000e+00 : f32
    %182 = vector.broadcast %cst_75 : f32 to vector<8x256xf32>
    %183 = arith.select %26, %181, %182 : vector<8x256xi1>, vector<8x256xf32>
    %c16_i32 = arith.constant 16 : i32
    %184 = tpu.dynamic_rotate %180 by %c16_i32 dim 1 : vector<8x256xf32>, i32 -> vector<8x256xf32>
    %cst_76 = arith.constant 0.000000e+00 : f32
    %185 = vector.broadcast %cst_76 : f32 to vector<8x256xf32>
    %186 = arith.select %45, %184, %185 : vector<8x256xi1>, vector<8x256xf32>
    %c15_i32 = arith.constant 15 : i32
    %187 = tpu.dynamic_rotate %180 by %c15_i32 dim 1 : vector<8x256xf32>, i32 -> vector<8x256xf32>
    %cst_77 = arith.constant 0.000000e+00 : f32
    %188 = vector.broadcast %cst_77 : f32 to vector<8x256xf32>
    %189 = arith.select %64, %187, %188 : vector<8x256xi1>, vector<8x256xf32>
    %c1_i32 = arith.constant 1 : i32
    %190 = tpu.dynamic_rotate %180 by %c1_i32 dim 1 : vector<8x256xf32>, i32 -> vector<8x256xf32>
    %cst_78 = arith.constant 0.000000e+00 : f32
    %191 = vector.broadcast %cst_78 : f32 to vector<8x256xf32>
    %192 = arith.select %83, %190, %191 : vector<8x256xi1>, vector<8x256xf32>
    %cst_79 = arith.constant 0.000000e+00 : f32
    %193 = vector.broadcast %cst_79 : f32 to vector<8x256xf32>
    %194 = arith.select %102, %180, %193 : vector<8x256xi1>, vector<8x256xf32>
    %c255_i32 = arith.constant 255 : i32
    %195 = tpu.dynamic_rotate %180 by %c255_i32 dim 1 : vector<8x256xf32>, i32 -> vector<8x256xf32>
    %cst_80 = arith.constant 0.000000e+00 : f32
    %196 = vector.broadcast %cst_80 : f32 to vector<8x256xf32>
    %197 = arith.select %121, %195, %196 : vector<8x256xi1>, vector<8x256xf32>
    %c241_i32 = arith.constant 241 : i32
    %198 = tpu.dynamic_rotate %180 by %c241_i32 dim 1 : vector<8x256xf32>, i32 -> vector<8x256xf32>
    %cst_81 = arith.constant 0.000000e+00 : f32
    %199 = vector.broadcast %cst_81 : f32 to vector<8x256xf32>
    %200 = arith.select %140, %198, %199 : vector<8x256xi1>, vector<8x256xf32>
    %c240_i32 = arith.constant 240 : i32
    %201 = tpu.dynamic_rotate %180 by %c240_i32 dim 1 : vector<8x256xf32>, i32 -> vector<8x256xf32>
    %cst_82 = arith.constant 0.000000e+00 : f32
    %202 = vector.broadcast %cst_82 : f32 to vector<8x256xf32>
    %203 = arith.select %159, %201, %202 : vector<8x256xi1>, vector<8x256xf32>
    %c239_i32 = arith.constant 239 : i32
    %204 = tpu.dynamic_rotate %180 by %c239_i32 dim 1 : vector<8x256xf32>, i32 -> vector<8x256xf32>
    %cst_83 = arith.constant 0.000000e+00 : f32
    %205 = vector.broadcast %cst_83 : f32 to vector<8x256xf32>
    %206 = arith.select %178, %204, %205 : vector<8x256xi1>, vector<8x256xf32>
    %207 = tpu.concatenate %183, %186, %189, %192, %194, %197, %200, %203, %206 in 0 : vector<8x256xf32>, vector<8x256xf32>, vector<8x256xf32>, vector<8x256xf32>, vector<8x256xf32>, vector<8x256xf32>, vector<8x256xf32>, vector<8x256xf32>, vector<8x256xf32> -> vector<72x256xf32>
    %c0_84 = arith.constant 0 : index
    %c0_85 = arith.constant 0 : index
    %208 = vector.load %arg2[%c0_84, %c0_85] : memref<8x72xf32, #tpu.memory_space<vmem>>, vector<8x72xf32>
    %cst_86 = arith.constant dense<0.000000e+00> : vector<8x256xf32>
    %209 = tpu.matmul %208, %207, %cst_86 {dimension_numbers = #tpu.dot_dimension_numbers<[1], [0], [0], [1], [0, 0, 1, 1], [], []>} : vector<8x72xf32>, vector<72x256xf32>, vector<8x256xf32> -> vector<8x256xf32>
    %c0_87 = arith.constant 0 : index
    %c0_88 = arith.constant 0 : index
    %210 = vector.load %arg3[%c0_87, %c0_88] : memref<8x1xf32, #tpu.memory_space<vmem>>, vector<8x1xf32>
    %211 = vector.broadcast %210 : vector<8x1xf32> to vector<8x256xf32>
    %212 = arith.addf %209, %211 : vector<8x256xf32>
    %cst_89 = arith.constant 5.000000e-01 : f32
    %213 = vector.broadcast %cst_89 : f32 to vector<8x256xf32>
    %214 = arith.mulf %213, %212 : vector<8x256xf32>
    %cst_90 = arith.constant 0.707106769 : f32
    %215 = vector.broadcast %cst_90 : f32 to vector<8x256xf32>
    %216 = arith.mulf %212, %215 : vector<8x256xf32>
    %cst_91 = arith.constant 0.000000e+00 : f32
    %217 = vector.broadcast %cst_91 : f32 to vector<8x256xf32>
    %218 = arith.cmpf oge, %216, %217 : vector<8x256xf32>
    %cst_92 = arith.constant 1.000000e+00 : f32
    %cst_93 = arith.constant -1.000000e+00 : f32
    %219 = vector.broadcast %cst_92 : f32 to vector<8x256xf32>
    %220 = vector.broadcast %cst_93 : f32 to vector<8x256xf32>
    %221 = arith.select %218, %219, %220 : vector<8x256xi1>, vector<8x256xf32>
    %222 = math.absf %216 : vector<8x256xf32>
    %cst_94 = arith.constant 0.327591091 : f32
    %223 = vector.broadcast %cst_94 : f32 to vector<8x256xf32>
    %224 = arith.mulf %223, %222 : vector<8x256xf32>
    %cst_95 = arith.constant 1.000000e+00 : f32
    %225 = vector.broadcast %cst_95 : f32 to vector<8x256xf32>
    %226 = arith.addf %225, %224 : vector<8x256xf32>
    %227 = tpu.reciprocal %226 {approx = true} : vector<8x256xf32> -> vector<8x256xf32>
    %cst_96 = arith.constant 1.06140542 : f32
    %228 = vector.broadcast %cst_96 : f32 to vector<8x256xf32>
    %229 = arith.mulf %228, %227 : vector<8x256xf32>
    %cst_97 = arith.constant -1.45315206 : f32
    %230 = vector.broadcast %cst_97 : f32 to vector<8x256xf32>
    %231 = arith.addf %229, %230 : vector<8x256xf32>
    %232 = arith.mulf %231, %227 : vector<8x256xf32>
    %cst_98 = arith.constant 1.42141378 : f32
    %233 = vector.broadcast %cst_98 : f32 to vector<8x256xf32>
    %234 = arith.addf %232, %233 : vector<8x256xf32>
    %235 = arith.mulf %234, %227 : vector<8x256xf32>
    %cst_99 = arith.constant -0.284496725 : f32
    %236 = vector.broadcast %cst_99 : f32 to vector<8x256xf32>
    %237 = arith.addf %235, %236 : vector<8x256xf32>
    %238 = arith.mulf %237, %227 : vector<8x256xf32>
    %cst_100 = arith.constant 0.254829586 : f32
    %239 = vector.broadcast %cst_100 : f32 to vector<8x256xf32>
    %240 = arith.addf %238, %239 : vector<8x256xf32>
    %241 = arith.mulf %240, %227 : vector<8x256xf32>
    %cst_101 = arith.constant 0.000000e+00 : f32
    %242 = vector.broadcast %cst_101 : f32 to vector<8x256xf32>
    %243 = arith.subf %242, %222 : vector<8x256xf32>
    %244 = arith.mulf %243, %222 : vector<8x256xf32>
    %245 = math.exp %244 : vector<8x256xf32>
    %246 = arith.mulf %241, %245 : vector<8x256xf32>
    %cst_102 = arith.constant 1.000000e+00 : f32
    %247 = vector.broadcast %cst_102 : f32 to vector<8x256xf32>
    %248 = arith.subf %247, %246 : vector<8x256xf32>
    %249 = arith.mulf %221, %248 : vector<8x256xf32>
    %cst_103 = arith.constant 1.000000e+00 : f32
    %250 = vector.broadcast %cst_103 : f32 to vector<8x256xf32>
    %251 = arith.addf %250, %249 : vector<8x256xf32>
    %252 = arith.mulf %214, %251 : vector<8x256xf32>
    %c17_i32_104 = arith.constant 17 : i32
    %253 = tpu.dynamic_rotate %252 by %c17_i32_104 dim 1 : vector<8x256xf32>, i32 -> vector<8x256xf32>
    %cst_105 = arith.constant 0.000000e+00 : f32
    %254 = vector.broadcast %cst_105 : f32 to vector<8x256xf32>
    %255 = arith.select %26, %253, %254 : vector<8x256xi1>, vector<8x256xf32>
    %c16_i32_106 = arith.constant 16 : i32
    %256 = tpu.dynamic_rotate %252 by %c16_i32_106 dim 1 : vector<8x256xf32>, i32 -> vector<8x256xf32>
    %cst_107 = arith.constant 0.000000e+00 : f32
    %257 = vector.broadcast %cst_107 : f32 to vector<8x256xf32>
    %258 = arith.select %45, %256, %257 : vector<8x256xi1>, vector<8x256xf32>
    %c15_i32_108 = arith.constant 15 : i32
    %259 = tpu.dynamic_rotate %252 by %c15_i32_108 dim 1 : vector<8x256xf32>, i32 -> vector<8x256xf32>
    %cst_109 = arith.constant 0.000000e+00 : f32
    %260 = vector.broadcast %cst_109 : f32 to vector<8x256xf32>
    %261 = arith.select %64, %259, %260 : vector<8x256xi1>, vector<8x256xf32>
    %c1_i32_110 = arith.constant 1 : i32
    %262 = tpu.dynamic_rotate %252 by %c1_i32_110 dim 1 : vector<8x256xf32>, i32 -> vector<8x256xf32>
    %cst_111 = arith.constant 0.000000e+00 : f32
    %263 = vector.broadcast %cst_111 : f32 to vector<8x256xf32>
    %264 = arith.select %83, %262, %263 : vector<8x256xi1>, vector<8x256xf32>
    %cst_112 = arith.constant 0.000000e+00 : f32
    %265 = vector.broadcast %cst_112 : f32 to vector<8x256xf32>
    %266 = arith.select %102, %252, %265 : vector<8x256xi1>, vector<8x256xf32>
    %c255_i32_113 = arith.constant 255 : i32
    %267 = tpu.dynamic_rotate %252 by %c255_i32_113 dim 1 : vector<8x256xf32>, i32 -> vector<8x256xf32>
    %cst_114 = arith.constant 0.000000e+00 : f32
    %268 = vector.broadcast %cst_114 : f32 to vector<8x256xf32>
    %269 = arith.select %121, %267, %268 : vector<8x256xi1>, vector<8x256xf32>
    %c241_i32_115 = arith.constant 241 : i32
    %270 = tpu.dynamic_rotate %252 by %c241_i32_115 dim 1 : vector<8x256xf32>, i32 -> vector<8x256xf32>
    %cst_116 = arith.constant 0.000000e+00 : f32
    %271 = vector.broadcast %cst_116 : f32 to vector<8x256xf32>
    %272 = arith.select %140, %270, %271 : vector<8x256xi1>, vector<8x256xf32>
    %c240_i32_117 = arith.constant 240 : i32
    %273 = tpu.dynamic_rotate %252 by %c240_i32_117 dim 1 : vector<8x256xf32>, i32 -> vector<8x256xf32>
    %cst_118 = arith.constant 0.000000e+00 : f32
    %274 = vector.broadcast %cst_118 : f32 to vector<8x256xf32>
    %275 = arith.select %159, %273, %274 : vector<8x256xi1>, vector<8x256xf32>
    %c239_i32_119 = arith.constant 239 : i32
    %276 = tpu.dynamic_rotate %252 by %c239_i32_119 dim 1 : vector<8x256xf32>, i32 -> vector<8x256xf32>
    %cst_120 = arith.constant 0.000000e+00 : f32
    %277 = vector.broadcast %cst_120 : f32 to vector<8x256xf32>
    %278 = arith.select %178, %276, %277 : vector<8x256xi1>, vector<8x256xf32>
    %279 = tpu.concatenate %255, %258, %261, %264, %266, %269, %272, %275, %278 in 0 : vector<8x256xf32>, vector<8x256xf32>, vector<8x256xf32>, vector<8x256xf32>, vector<8x256xf32>, vector<8x256xf32>, vector<8x256xf32>, vector<8x256xf32>, vector<8x256xf32> -> vector<72x256xf32>
    %c0_121 = arith.constant 0 : index
    %c0_122 = arith.constant 0 : index
    %280 = vector.load %arg4[%c0_121, %c0_122] : memref<8x72xf32, #tpu.memory_space<vmem>>, vector<8x72xf32>
    %cst_123 = arith.constant dense<0.000000e+00> : vector<8x256xf32>
    %281 = tpu.matmul %280, %279, %cst_123 {dimension_numbers = #tpu.dot_dimension_numbers<[1], [0], [0], [1], [0, 0, 1, 1], [], []>} : vector<8x72xf32>, vector<72x256xf32>, vector<8x256xf32> -> vector<8x256xf32>
    %c0_124 = arith.constant 0 : index
    %c0_125 = arith.constant 0 : index
    %282 = vector.load %arg5[%c0_124, %c0_125] : memref<8x1xf32, #tpu.memory_space<vmem>>, vector<8x1xf32>
    %283 = vector.broadcast %282 : vector<8x1xf32> to vector<8x256xf32>
    %284 = arith.addf %281, %283 : vector<8x256xf32>
    %cst_126 = arith.constant 5.000000e-01 : f32
    %285 = vector.broadcast %cst_126 : f32 to vector<8x256xf32>
    %286 = arith.mulf %285, %284 : vector<8x256xf32>
    %cst_127 = arith.constant 0.707106769 : f32
    %287 = vector.broadcast %cst_127 : f32 to vector<8x256xf32>
    %288 = arith.mulf %284, %287 : vector<8x256xf32>
    %cst_128 = arith.constant 0.000000e+00 : f32
    %289 = vector.broadcast %cst_128 : f32 to vector<8x256xf32>
    %290 = arith.cmpf oge, %288, %289 : vector<8x256xf32>
    %cst_129 = arith.constant 1.000000e+00 : f32
    %cst_130 = arith.constant -1.000000e+00 : f32
    %291 = vector.broadcast %cst_129 : f32 to vector<8x256xf32>
    %292 = vector.broadcast %cst_130 : f32 to vector<8x256xf32>
    %293 = arith.select %290, %291, %292 : vector<8x256xi1>, vector<8x256xf32>
    %294 = math.absf %288 : vector<8x256xf32>
    %cst_131 = arith.constant 0.327591091 : f32
    %295 = vector.broadcast %cst_131 : f32 to vector<8x256xf32>
    %296 = arith.mulf %295, %294 : vector<8x256xf32>
    %cst_132 = arith.constant 1.000000e+00 : f32
    %297 = vector.broadcast %cst_132 : f32 to vector<8x256xf32>
    %298 = arith.addf %297, %296 : vector<8x256xf32>
    %299 = tpu.reciprocal %298 {approx = true} : vector<8x256xf32> -> vector<8x256xf32>
    %cst_133 = arith.constant 1.06140542 : f32
    %300 = vector.broadcast %cst_133 : f32 to vector<8x256xf32>
    %301 = arith.mulf %300, %299 : vector<8x256xf32>
    %cst_134 = arith.constant -1.45315206 : f32
    %302 = vector.broadcast %cst_134 : f32 to vector<8x256xf32>
    %303 = arith.addf %301, %302 : vector<8x256xf32>
    %304 = arith.mulf %303, %299 : vector<8x256xf32>
    %cst_135 = arith.constant 1.42141378 : f32
    %305 = vector.broadcast %cst_135 : f32 to vector<8x256xf32>
    %306 = arith.addf %304, %305 : vector<8x256xf32>
    %307 = arith.mulf %306, %299 : vector<8x256xf32>
    %cst_136 = arith.constant -0.284496725 : f32
    %308 = vector.broadcast %cst_136 : f32 to vector<8x256xf32>
    %309 = arith.addf %307, %308 : vector<8x256xf32>
    %310 = arith.mulf %309, %299 : vector<8x256xf32>
    %cst_137 = arith.constant 0.254829586 : f32
    %311 = vector.broadcast %cst_137 : f32 to vector<8x256xf32>
    %312 = arith.addf %310, %311 : vector<8x256xf32>
    %313 = arith.mulf %312, %299 : vector<8x256xf32>
    %cst_138 = arith.constant 0.000000e+00 : f32
    %314 = vector.broadcast %cst_138 : f32 to vector<8x256xf32>
    %315 = arith.subf %314, %294 : vector<8x256xf32>
    %316 = arith.mulf %315, %294 : vector<8x256xf32>
    %317 = math.exp %316 : vector<8x256xf32>
    %318 = arith.mulf %313, %317 : vector<8x256xf32>
    %cst_139 = arith.constant 1.000000e+00 : f32
    %319 = vector.broadcast %cst_139 : f32 to vector<8x256xf32>
    %320 = arith.subf %319, %318 : vector<8x256xf32>
    %321 = arith.mulf %293, %320 : vector<8x256xf32>
    %cst_140 = arith.constant 1.000000e+00 : f32
    %322 = vector.broadcast %cst_140 : f32 to vector<8x256xf32>
    %323 = arith.addf %322, %321 : vector<8x256xf32>
    %324 = arith.mulf %286, %323 : vector<8x256xf32>
    %c17_i32_141 = arith.constant 17 : i32
    %325 = tpu.dynamic_rotate %324 by %c17_i32_141 dim 1 : vector<8x256xf32>, i32 -> vector<8x256xf32>
    %cst_142 = arith.constant 0.000000e+00 : f32
    %326 = vector.broadcast %cst_142 : f32 to vector<8x256xf32>
    %327 = arith.select %26, %325, %326 : vector<8x256xi1>, vector<8x256xf32>
    %c16_i32_143 = arith.constant 16 : i32
    %328 = tpu.dynamic_rotate %324 by %c16_i32_143 dim 1 : vector<8x256xf32>, i32 -> vector<8x256xf32>
    %cst_144 = arith.constant 0.000000e+00 : f32
    %329 = vector.broadcast %cst_144 : f32 to vector<8x256xf32>
    %330 = arith.select %45, %328, %329 : vector<8x256xi1>, vector<8x256xf32>
    %c15_i32_145 = arith.constant 15 : i32
    %331 = tpu.dynamic_rotate %324 by %c15_i32_145 dim 1 : vector<8x256xf32>, i32 -> vector<8x256xf32>
    %cst_146 = arith.constant 0.000000e+00 : f32
    %332 = vector.broadcast %cst_146 : f32 to vector<8x256xf32>
    %333 = arith.select %64, %331, %332 : vector<8x256xi1>, vector<8x256xf32>
    %c1_i32_147 = arith.constant 1 : i32
    %334 = tpu.dynamic_rotate %324 by %c1_i32_147 dim 1 : vector<8x256xf32>, i32 -> vector<8x256xf32>
    %cst_148 = arith.constant 0.000000e+00 : f32
    %335 = vector.broadcast %cst_148 : f32 to vector<8x256xf32>
    %336 = arith.select %83, %334, %335 : vector<8x256xi1>, vector<8x256xf32>
    %cst_149 = arith.constant 0.000000e+00 : f32
    %337 = vector.broadcast %cst_149 : f32 to vector<8x256xf32>
    %338 = arith.select %102, %324, %337 : vector<8x256xi1>, vector<8x256xf32>
    %c255_i32_150 = arith.constant 255 : i32
    %339 = tpu.dynamic_rotate %324 by %c255_i32_150 dim 1 : vector<8x256xf32>, i32 -> vector<8x256xf32>
    %cst_151 = arith.constant 0.000000e+00 : f32
    %340 = vector.broadcast %cst_151 : f32 to vector<8x256xf32>
    %341 = arith.select %121, %339, %340 : vector<8x256xi1>, vector<8x256xf32>
    %c241_i32_152 = arith.constant 241 : i32
    %342 = tpu.dynamic_rotate %324 by %c241_i32_152 dim 1 : vector<8x256xf32>, i32 -> vector<8x256xf32>
    %cst_153 = arith.constant 0.000000e+00 : f32
    %343 = vector.broadcast %cst_153 : f32 to vector<8x256xf32>
    %344 = arith.select %140, %342, %343 : vector<8x256xi1>, vector<8x256xf32>
    %c240_i32_154 = arith.constant 240 : i32
    %345 = tpu.dynamic_rotate %324 by %c240_i32_154 dim 1 : vector<8x256xf32>, i32 -> vector<8x256xf32>
    %cst_155 = arith.constant 0.000000e+00 : f32
    %346 = vector.broadcast %cst_155 : f32 to vector<8x256xf32>
    %347 = arith.select %159, %345, %346 : vector<8x256xi1>, vector<8x256xf32>
    %c239_i32_156 = arith.constant 239 : i32
    %348 = tpu.dynamic_rotate %324 by %c239_i32_156 dim 1 : vector<8x256xf32>, i32 -> vector<8x256xf32>
    %cst_157 = arith.constant 0.000000e+00 : f32
    %349 = vector.broadcast %cst_157 : f32 to vector<8x256xf32>
    %350 = arith.select %178, %348, %349 : vector<8x256xi1>, vector<8x256xf32>
    %351 = tpu.concatenate %327, %330, %333, %336, %338, %341, %344, %347, %350 in 0 : vector<8x256xf32>, vector<8x256xf32>, vector<8x256xf32>, vector<8x256xf32>, vector<8x256xf32>, vector<8x256xf32>, vector<8x256xf32>, vector<8x256xf32>, vector<8x256xf32> -> vector<72x256xf32>
    %c0_158 = arith.constant 0 : index
    %c0_159 = arith.constant 0 : index
    %352 = vector.load %arg6[%c0_158, %c0_159] : memref<8x72xf32, #tpu.memory_space<vmem>>, vector<8x72xf32>
    %cst_160 = arith.constant dense<0.000000e+00> : vector<8x256xf32>
    %353 = tpu.matmul %352, %351, %cst_160 {dimension_numbers = #tpu.dot_dimension_numbers<[1], [0], [0], [1], [0, 0, 1, 1], [], []>} : vector<8x72xf32>, vector<72x256xf32>, vector<8x256xf32> -> vector<8x256xf32>
    %c0_161 = arith.constant 0 : index
    %c0_162 = arith.constant 0 : index
    %354 = vector.load %arg7[%c0_161, %c0_162] : memref<8x1xf32, #tpu.memory_space<vmem>>, vector<8x1xf32>
    %355 = vector.broadcast %354 : vector<8x1xf32> to vector<8x256xf32>
    %356 = arith.addf %353, %355 : vector<8x256xf32>
    %cst_163 = arith.constant 5.000000e-01 : f32
    %357 = vector.broadcast %cst_163 : f32 to vector<8x256xf32>
    %358 = arith.mulf %357, %356 : vector<8x256xf32>
    %cst_164 = arith.constant 0.707106769 : f32
    %359 = vector.broadcast %cst_164 : f32 to vector<8x256xf32>
    %360 = arith.mulf %356, %359 : vector<8x256xf32>
    %cst_165 = arith.constant 0.000000e+00 : f32
    %361 = vector.broadcast %cst_165 : f32 to vector<8x256xf32>
    %362 = arith.cmpf oge, %360, %361 : vector<8x256xf32>
    %cst_166 = arith.constant 1.000000e+00 : f32
    %cst_167 = arith.constant -1.000000e+00 : f32
    %363 = vector.broadcast %cst_166 : f32 to vector<8x256xf32>
    %364 = vector.broadcast %cst_167 : f32 to vector<8x256xf32>
    %365 = arith.select %362, %363, %364 : vector<8x256xi1>, vector<8x256xf32>
    %366 = math.absf %360 : vector<8x256xf32>
    %cst_168 = arith.constant 0.327591091 : f32
    %367 = vector.broadcast %cst_168 : f32 to vector<8x256xf32>
    %368 = arith.mulf %367, %366 : vector<8x256xf32>
    %cst_169 = arith.constant 1.000000e+00 : f32
    %369 = vector.broadcast %cst_169 : f32 to vector<8x256xf32>
    %370 = arith.addf %369, %368 : vector<8x256xf32>
    %371 = tpu.reciprocal %370 {approx = true} : vector<8x256xf32> -> vector<8x256xf32>
    %cst_170 = arith.constant 1.06140542 : f32
    %372 = vector.broadcast %cst_170 : f32 to vector<8x256xf32>
    %373 = arith.mulf %372, %371 : vector<8x256xf32>
    %cst_171 = arith.constant -1.45315206 : f32
    %374 = vector.broadcast %cst_171 : f32 to vector<8x256xf32>
    %375 = arith.addf %373, %374 : vector<8x256xf32>
    %376 = arith.mulf %375, %371 : vector<8x256xf32>
    %cst_172 = arith.constant 1.42141378 : f32
    %377 = vector.broadcast %cst_172 : f32 to vector<8x256xf32>
    %378 = arith.addf %376, %377 : vector<8x256xf32>
    %379 = arith.mulf %378, %371 : vector<8x256xf32>
    %cst_173 = arith.constant -0.284496725 : f32
    %380 = vector.broadcast %cst_173 : f32 to vector<8x256xf32>
    %381 = arith.addf %379, %380 : vector<8x256xf32>
    %382 = arith.mulf %381, %371 : vector<8x256xf32>
    %cst_174 = arith.constant 0.254829586 : f32
    %383 = vector.broadcast %cst_174 : f32 to vector<8x256xf32>
    %384 = arith.addf %382, %383 : vector<8x256xf32>
    %385 = arith.mulf %384, %371 : vector<8x256xf32>
    %cst_175 = arith.constant 0.000000e+00 : f32
    %386 = vector.broadcast %cst_175 : f32 to vector<8x256xf32>
    %387 = arith.subf %386, %366 : vector<8x256xf32>
    %388 = arith.mulf %387, %366 : vector<8x256xf32>
    %389 = math.exp %388 : vector<8x256xf32>
    %390 = arith.mulf %385, %389 : vector<8x256xf32>
    %cst_176 = arith.constant 1.000000e+00 : f32
    %391 = vector.broadcast %cst_176 : f32 to vector<8x256xf32>
    %392 = arith.subf %391, %390 : vector<8x256xf32>
    %393 = arith.mulf %365, %392 : vector<8x256xf32>
    %cst_177 = arith.constant 1.000000e+00 : f32
    %394 = vector.broadcast %cst_177 : f32 to vector<8x256xf32>
    %395 = arith.addf %394, %393 : vector<8x256xf32>
    %396 = arith.mulf %358, %395 : vector<8x256xf32>
    %c17_i32_178 = arith.constant 17 : i32
    %397 = tpu.dynamic_rotate %396 by %c17_i32_178 dim 1 : vector<8x256xf32>, i32 -> vector<8x256xf32>
    %cst_179 = arith.constant 0.000000e+00 : f32
    %398 = vector.broadcast %cst_179 : f32 to vector<8x256xf32>
    %399 = arith.select %26, %397, %398 : vector<8x256xi1>, vector<8x256xf32>
    %c16_i32_180 = arith.constant 16 : i32
    %400 = tpu.dynamic_rotate %396 by %c16_i32_180 dim 1 : vector<8x256xf32>, i32 -> vector<8x256xf32>
    %cst_181 = arith.constant 0.000000e+00 : f32
    %401 = vector.broadcast %cst_181 : f32 to vector<8x256xf32>
    %402 = arith.select %45, %400, %401 : vector<8x256xi1>, vector<8x256xf32>
    %c15_i32_182 = arith.constant 15 : i32
    %403 = tpu.dynamic_rotate %396 by %c15_i32_182 dim 1 : vector<8x256xf32>, i32 -> vector<8x256xf32>
    %cst_183 = arith.constant 0.000000e+00 : f32
    %404 = vector.broadcast %cst_183 : f32 to vector<8x256xf32>
    %405 = arith.select %64, %403, %404 : vector<8x256xi1>, vector<8x256xf32>
    %c1_i32_184 = arith.constant 1 : i32
    %406 = tpu.dynamic_rotate %396 by %c1_i32_184 dim 1 : vector<8x256xf32>, i32 -> vector<8x256xf32>
    %cst_185 = arith.constant 0.000000e+00 : f32
    %407 = vector.broadcast %cst_185 : f32 to vector<8x256xf32>
    %408 = arith.select %83, %406, %407 : vector<8x256xi1>, vector<8x256xf32>
    %cst_186 = arith.constant 0.000000e+00 : f32
    %409 = vector.broadcast %cst_186 : f32 to vector<8x256xf32>
    %410 = arith.select %102, %396, %409 : vector<8x256xi1>, vector<8x256xf32>
    %c255_i32_187 = arith.constant 255 : i32
    %411 = tpu.dynamic_rotate %396 by %c255_i32_187 dim 1 : vector<8x256xf32>, i32 -> vector<8x256xf32>
    %cst_188 = arith.constant 0.000000e+00 : f32
    %412 = vector.broadcast %cst_188 : f32 to vector<8x256xf32>
    %413 = arith.select %121, %411, %412 : vector<8x256xi1>, vector<8x256xf32>
    %c241_i32_189 = arith.constant 241 : i32
    %414 = tpu.dynamic_rotate %396 by %c241_i32_189 dim 1 : vector<8x256xf32>, i32 -> vector<8x256xf32>
    %cst_190 = arith.constant 0.000000e+00 : f32
    %415 = vector.broadcast %cst_190 : f32 to vector<8x256xf32>
    %416 = arith.select %140, %414, %415 : vector<8x256xi1>, vector<8x256xf32>
    %c240_i32_191 = arith.constant 240 : i32
    %417 = tpu.dynamic_rotate %396 by %c240_i32_191 dim 1 : vector<8x256xf32>, i32 -> vector<8x256xf32>
    %cst_192 = arith.constant 0.000000e+00 : f32
    %418 = vector.broadcast %cst_192 : f32 to vector<8x256xf32>
    %419 = arith.select %159, %417, %418 : vector<8x256xi1>, vector<8x256xf32>
    %c239_i32_193 = arith.constant 239 : i32
    %420 = tpu.dynamic_rotate %396 by %c239_i32_193 dim 1 : vector<8x256xf32>, i32 -> vector<8x256xf32>
    %cst_194 = arith.constant 0.000000e+00 : f32
    %421 = vector.broadcast %cst_194 : f32 to vector<8x256xf32>
    %422 = arith.select %178, %420, %421 : vector<8x256xi1>, vector<8x256xf32>
    %423 = tpu.concatenate %399, %402, %405, %408, %410, %413, %416, %419, %422 in 0 : vector<8x256xf32>, vector<8x256xf32>, vector<8x256xf32>, vector<8x256xf32>, vector<8x256xf32>, vector<8x256xf32>, vector<8x256xf32>, vector<8x256xf32>, vector<8x256xf32> -> vector<72x256xf32>
    %c0_195 = arith.constant 0 : index
    %c0_196 = arith.constant 0 : index
    %424 = vector.load %arg8[%c0_195, %c0_196] : memref<8x72xf32, #tpu.memory_space<vmem>>, vector<8x72xf32>
    %cst_197 = arith.constant dense<0.000000e+00> : vector<8x256xf32>
    %425 = tpu.matmul %424, %423, %cst_197 {dimension_numbers = #tpu.dot_dimension_numbers<[1], [0], [0], [1], [0, 0, 1, 1], [], []>} : vector<8x72xf32>, vector<72x256xf32>, vector<8x256xf32> -> vector<8x256xf32>
    %c0_198 = arith.constant 0 : index
    %c0_199 = arith.constant 0 : index
    %426 = vector.load %arg9[%c0_198, %c0_199] : memref<8x1xf32, #tpu.memory_space<vmem>>, vector<8x1xf32>
    %427 = vector.broadcast %426 : vector<8x1xf32> to vector<8x256xf32>
    %428 = arith.addf %425, %427 : vector<8x256xf32>
    %429 = math.tanh %428 : vector<8x256xf32>
    %cst_200 = arith.constant 5.000000e-01 : f32
    %430 = vector.broadcast %cst_200 : f32 to vector<8x256xf32>
    %431 = arith.mulf %430, %429 : vector<8x256xf32>
    %c0_201 = arith.constant 0 : index
    %c0_202 = arith.constant 0 : index
    %c0_203 = arith.constant 0 : index
    %432 = vector.load %arg10[%c0_201, %c0_202, %c0_203] : memref<1x8x256xf32, #tpu.memory_space<vmem>>, vector<1x8x256xf32>
    %433 = vector.shape_cast %432 : vector<1x8x256xf32> to vector<8x256xf32>
    %434 = vector.shape_cast %431 : vector<8x256xf32> to vector<1x8x256xf32>
    tpu.vector_store %arg10[%c0_201, %c0_202, %c0_203], %434 {strides = array<i32>} : memref<1x8x256xf32, #tpu.memory_space<vmem>>, vector<1x8x256xf32>,
    return
  }
  func.func @transform_0(%arg0: i32) -> (i32, i32, i32) {
    %c0_i32 = arith.constant 0 : i32
    %c0_i32_0 = arith.constant 0 : i32
    %c0_i32_1 = arith.constant 0 : i32
    return %arg0, %c0_i32, %c0_i32_0 : i32, i32, i32
  }
  func.func @transform_1(%arg0: i32) -> (i32, i32) {
    %c0_i32 = arith.constant 0 : i32
    %c0_i32_0 = arith.constant 0 : i32
    %c0_i32_1 = arith.constant 0 : i32
    return %c0_i32, %c0_i32_0 : i32, i32
  }
  func.func @transform_2(%arg0: i32) -> (i32, i32) {
    %c0_i32 = arith.constant 0 : i32
    %c0_i32_0 = arith.constant 0 : i32
    %c0_i32_1 = arith.constant 0 : i32
    return %c0_i32, %c0_i32_0 : i32, i32
  }
  func.func @transform_3(%arg0: i32) -> (i32, i32) {
    %c0_i32 = arith.constant 0 : i32
    %c0_i32_0 = arith.constant 0 : i32
    %c0_i32_1 = arith.constant 0 : i32
    return %c0_i32, %c0_i32_0 : i32, i32
  }
  func.func @transform_4(%arg0: i32) -> (i32, i32) {
    %c0_i32 = arith.constant 0 : i32
    %c0_i32_0 = arith.constant 0 : i32
    %c0_i32_1 = arith.constant 0 : i32
    return %c0_i32, %c0_i32_0 : i32, i32
  }
  func.func @transform_5(%arg0: i32) -> (i32, i32) {
    %c0_i32 = arith.constant 0 : i32
    %c0_i32_0 = arith.constant 0 : i32
    %c0_i32_1 = arith.constant 0 : i32
    return %c0_i32, %c0_i32_0 : i32, i32
  }
  func.func @transform_6(%arg0: i32) -> (i32, i32) {
    %c0_i32 = arith.constant 0 : i32
    %c0_i32_0 = arith.constant 0 : i32
    %c0_i32_1 = arith.constant 0 : i32
    return %c0_i32, %c0_i32_0 : i32, i32
  }
  func.func @transform_7(%arg0: i32) -> (i32, i32) {
    %c0_i32 = arith.constant 0 : i32
    %c0_i32_0 = arith.constant 0 : i32
    %c0_i32_1 = arith.constant 0 : i32
    return %c0_i32, %c0_i32_0 : i32, i32
  }
  func.func @transform_8(%arg0: i32) -> (i32, i32) {
    %c0_i32 = arith.constant 0 : i32
    %c0_i32_0 = arith.constant 0 : i32
    %c0_i32_1 = arith.constant 0 : i32
    return %c0_i32, %c0_i32_0 : i32, i32
  }
  func.func @transform_9(%arg0: i32) -> (i32, i32, i32) {
    %c0_i32 = arith.constant 0 : i32
    %c0_i32_0 = arith.constant 0 : i32
    %c0_i32_1 = arith.constant 0 : i32
    return %arg0, %c0_i32, %c0_i32_0 : i32, i32, i32
  }
}

</mosaic_0001>

<llo_original>
// kernel: tpu_custom_call.1
$region0: #{tpu_custom_call.1}
  #allocation0 [shape = 'u32[]', space=smem, size = 0x4, offset = 0x4, fixed_abs, tag = 'smem constant byte address 0x4 - core index']
  #allocation1 [shape = 'u32[144,128]{1,0:T(1,128)}', space=vmem, size = 0x12000, scoped, tag = 'internal scratch']
  %s0 = inlined_call_operand.vmem [shape: f32[2,8,256], index: 0, kind: input, shape index: {}]
  %s1 = inlined_call_operand.hbm [shape: f32[8,72], index: 1, kind: input, shape index: {}]
  %s2 = inlined_call_operand.vmem [shape: f32[8,1], index: 2, kind: input, shape index: {}]
  %s3 = inlined_call_operand.vmem [shape: f32[8,72], index: 3, kind: input, shape index: {}]
  %s4 = inlined_call_operand.vmem [shape: f32[8,1], index: 4, kind: input, shape index: {}]
  %s5 = inlined_call_operand.vmem [shape: f32[8,72], index: 5, kind: input, shape index: {}]
  %s6 = inlined_call_operand.vmem [shape: f32[8,1], index: 6, kind: input, shape index: {}]
  %s7 = inlined_call_operand.vmem [shape: f32[8,72], index: 7, kind: input, shape index: {}]
  %s8 = inlined_call_operand.vmem [shape: f32[8,1], index: 8, kind: input, shape index: {}]
  %s9 = inlined_call_operand.hbm [shape: f32[2,8,256], index: 9, kind: output, shape index: {}]
  %s10 = sld [smem:[#allocation0]]
  $region73: #{tpu_custom_call.1} parent=0
    _
  %s12 = ssub.s32 1, %s10
  %s13 = scalar_select 0, %s12, %s10
  $region1: #{tpu_custom_call.1} parent=0
    #allocation2 [shape = 'u8[4096]{0}', space=vmem, size = 0x1000, scoped, tag = 'input window, operand 1, single buffered']
    #allocation3 [shape = 's32[2]{0}', space=sflag, size = 0x8, scoped, tag = 'scoped memory for tpu_custom_call.1']
    #allocation4 [shape = 's32[2]{0}', space=sflag, size = 0x8, scoped, tag = 'scoped memory for tpu_custom_call.1']
    #allocation5 [shape = 'u8[16384]{0}', space=vmem, size = 0x4000, scoped, tag = 'output window, operand 0']
    %14 = vsyncpa [#allocation3], 0
    %15 = vsyncpa [#allocation4], 0
    %s16 = scalar_lea.sflag [#allocation4], 1
    %17 = vsyncpa %s16, 0
    loop: start=0, step=1, limit=4
    $region2: #{tpu_custom_call.1} parent=1 // loop_pre_header
      _
    $region3: #{tpu_custom_call.1} parent=1 // loop_header
      %s19 = sphi 0, %s23
      %p20 = scmp.ge.s32.totalorder %s19, 4
      %s29 = sphi 0, %s31
      %s32 = sphi 0, %s29
      %s33 = sphi 0, %s32
      %s49 = sphi 0, %s33
      %s53 = sphi 0, %s53
      %s55 = sphi 0, %s53
      %s56 = sphi 0, %s55
      %s70 = sphi 0, %s56
      %s74 = sphi 0, %s74
      %s76 = sphi 0, %s74
      %s77 = sphi 0, %s76
      %s91 = sphi 0, %s77
      %s95 = sphi 0, %s95
      %s97 = sphi 0, %s95
      %s98 = sphi 0, %s97
      %s112 = sphi 0, %s98
      %s116 = sphi 0, %s116
      %s118 = sphi 0, %s116
      %s119 = sphi 0, %s118
      %s133 = sphi 0, %s119
      %s137 = sphi 0, %s137
      %s139 = sphi 0, %s137
      %s140 = sphi 0, %s139
      %s154 = sphi 0, %s140
      %s158 = sphi 0, %s158
      %s160 = sphi 0, %s158
      %s161 = sphi 0, %s160
      %s175 = sphi 0, %s161
      %s179 = sphi 0, %s179
      %s181 = sphi 0, %s179
      %s182 = sphi 0, %s181
      %s196 = sphi 0, %s182
      %s200 = sphi 0, %s200
      %s202 = sphi 0, %s200
      %s203 = sphi 0, %s202
      %s217 = sphi 0, %s203
      %s223 = sphi 0, %s225
      %s226 = sphi 0, %s223
      %s227 = sphi 0, %s226
      %s243 = sphi 0, %s227
    $region4: #{tpu_custom_call.1} parent=1 // loop_header_branch
      %22 = sbr.rel (%p20) target = $region8
    $region5: #{tpu_custom_call.1} parent=1 // loop_body
      %s24 = ssub.s32 %s19, 1
      %s25 = ssub.s32 %s19, 2
      %s26 = sadd.s32 %s19, 1
      %s27 = ssub.s32 %s19, %s26
      %p28 = scmp.eq.s32.totalorder %s27, 0
      %s30 = sadd.s32 %s29, 1
      %s31 = scalar_select %p28, %s29, %s30
      %p34 = pneg %p28
      %p35 = scmp.eq.s32.totalorder %s19, 1
      %p36 = por %p34, %p35
      %p37 = scmp.ne.s32.totalorder %s29, %s32
      %p38 = scmp.eq.s32.totalorder %s19, 0
      %p39 = por %p37, %p38
      %p40 = scmp.ne.s32.totalorder %s29, %s32
      %p41 = scmp.eq.s32.totalorder %s24, 1
      %p42 = por %p40, %p41
      %p43 = scmp.ne.s32.totalorder %s32, %s33
      %p44 = scmp.eq.s32.totalorder %s24, 0
      %p45 = por %p43, %p44
      %p46 = scmp.ne.s32.totalorder %s32, %s33
      %p47 = scmp.eq.s32.totalorder %s25, 1
      %p48 = por %p46, %p47
      %p50 = scmp.ne.s32.totalorder %s33, %s49
      %p51 = scmp.eq.s32.totalorder %s25, 0
      %p52 = por %p50, %p51
      %s54 = sadd.s32 %s53, 1
      %p57 = scmp.eq.s32.totalorder %s19, 1
      %p58 = scmp.ne.s32.totalorder %s53, %s55
      %p59 = scmp.eq.s32.totalorder %s19, 0
      %p60 = por %p58, %p59
      %p61 = scmp.ne.s32.totalorder %s53, %s55
      %p62 = scmp.eq.s32.totalorder %s24, 1
      %p63 = por %p61, %p62
      %p64 = scmp.ne.s32.totalorder %s55, %s56
      %p65 = scmp.eq.s32.totalorder %s24, 0
      %p66 = por %p64, %p65
      %p67 = scmp.ne.s32.totalorder %s55, %s56
      %p68 = scmp.eq.s32.totalorder %s25, 1
      %p69 = por %p67, %p68
      %p71 = scmp.ne.s32.totalorder %s56, %s70
      %p72 = scmp.eq.s32.totalorder %s25, 0
      %p73 = por %p71, %p72
      %s75 = sadd.s32 %s74, 1
      %p78 = scmp.eq.s32.totalorder %s19, 1
      %p79 = scmp.ne.s32.totalorder %s74, %s76
      %p80 = scmp.eq.s32.totalorder %s19, 0
      %p81 = por %p79, %p80
      %p82 = scmp.ne.s32.totalorder %s74, %s76
      %p83 = scmp.eq.s32.totalorder %s24, 1
      %p84 = por %p82, %p83
      %p85 = scmp.ne.s32.totalorder %s76, %s77
      %p86 = scmp.eq.s32.totalorder %s24, 0
      %p87 = por %p85, %p86
      %p88 = scmp.ne.s32.totalorder %s76, %s77
      %p89 = scmp.eq.s32.totalorder %s25, 1
      %p90 = por %p88, %p89
      %p92 = scmp.ne.s32.totalorder %s77, %s91
      %p93 = scmp.eq.s32.totalorder %s25, 0
      %p94 = por %p92, %p93
      %s96 = sadd.s32 %s95, 1
      %p99 = scmp.eq.s32.totalorder %s19, 1
      %p100 = scmp.ne.s32.totalorder %s95, %s97
      %p101 = scmp.eq.s32.totalorder %s19, 0
      %p102 = por %p100, %p101
      %p103 = scmp.ne.s32.totalorder %s95, %s97
      %p104 = scmp.eq.s32.totalorder %s24, 1
      %p105 = por %p103, %p104
      %p106 = scmp.ne.s32.totalorder %s97, %s98
      %p107 = scmp.eq.s32.totalorder %s24, 0
      %p108 = por %p106, %p107
      %p109 = scmp.ne.s32.totalorder %s97, %s98
      %p110 = scmp.eq.s32.totalorder %s25, 1
      %p111 = por %p109, %p110
      %p113 = scmp.ne.s32.totalorder %s98, %s112
      %p114 = scmp.eq.s32.totalorder %s25, 0
      %p115 = por %p113, %p114
      %s117 = sadd.s32 %s116, 1
      %p120 = scmp.eq.s32.totalorder %s19, 1
      %p121 = scmp.ne.s32.totalorder %s116, %s118
      %p122 = scmp.eq.s32.totalorder %s19, 0
      %p123 = por %p121, %p122
      %p124 = scmp.ne.s32.totalorder %s116, %s118
      %p125 = scmp.eq.s32.totalorder %s24, 1
      %p126 = por %p124, %p125
      %p127 = scmp.ne.s32.totalorder %s118, %s119
      %p128 = scmp.eq.s32.totalorder %s24, 0
      %p129 = por %p127, %p128
      %p130 = scmp.ne.s32.totalorder %s118, %s119
      %p131 = scmp.eq.s32.totalorder %s25, 1
      %p132 = por %p130, %p131
      %p134 = scmp.ne.s32.totalorder %s119, %s133
      %p135 = scmp.eq.s32.totalorder %s25, 0
      %p136 = por %p134, %p135
      %s138 = sadd.s32 %s137, 1
      %p141 = scmp.eq.s32.totalorder %s19, 1
      %p142 = scmp.ne.s32.totalorder %s137, %s139
      %p143 = scmp.eq.s32.totalorder %s19, 0
      %p144 = por %p142, %p143
      %p145 = scmp.ne.s32.totalorder %s137, %s139
      %p146 = scmp.eq.s32.totalorder %s24, 1
      %p147 = por %p145, %p146
      %p148 = scmp.ne.s32.totalorder %s139, %s140
      %p149 = scmp.eq.s32.totalorder %s24, 0
      %p150 = por %p148, %p149
      %p151 = scmp.ne.s32.totalorder %s139, %s140
      %p152 = scmp.eq.s32.totalorder %s25, 1
      %p153 = por %p151, %p152
      %p155 = scmp.ne.s32.totalorder %s140, %s154
      %p156 = scmp.eq.s32.totalorder %s25, 0
      %p157 = por %p155, %p156
      %s159 = sadd.s32 %s158, 1
      %p162 = scmp.eq.s32.totalorder %s19, 1
      %p163 = scmp.ne.s32.totalorder %s158, %s160
      %p164 = scmp.eq.s32.totalorder %s19, 0
      %p165 = por %p163, %p164
      %p166 = scmp.ne.s32.totalorder %s158, %s160
      %p167 = scmp.eq.s32.totalorder %s24, 1
      %p168 = por %p166, %p167
      %p169 = scmp.ne.s32.totalorder %s160, %s161
      %p170 = scmp.eq.s32.totalorder %s24, 0
      %p171 = por %p169, %p170
      %p172 = scmp.ne.s32.totalorder %s160, %s161
      %p173 = scmp.eq.s32.totalorder %s25, 1
      %p174 = por %p172, %p173
      %p176 = scmp.ne.s32.totalorder %s161, %s175
      %p177 = scmp.eq.s32.totalorder %s25, 0
      %p178 = por %p176, %p177
      %s180 = sadd.s32 %s179, 1
      %p183 = scmp.eq.s32.totalorder %s19, 1
      %p184 = scmp.ne.s32.totalorder %s179, %s181
      %p185 = scmp.eq.s32.totalorder %s19, 0
      %p186 = por %p184, %p185
      %p187 = scmp.ne.s32.totalorder %s179, %s181
      %p188 = scmp.eq.s32.totalorder %s24, 1
      %p189 = por %p187, %p188
      %p190 = scmp.ne.s32.totalorder %s181, %s182
      %p191 = scmp.eq.s32.totalorder %s24, 0
      %p192 = por %p190, %p191
      %p193 = scmp.ne.s32.totalorder %s181, %s182
      %p194 = scmp.eq.s32.totalorder %s25, 1
      %p195 = por %p193, %p194
      %p197 = scmp.ne.s32.totalorder %s182, %s196
      %p198 = scmp.eq.s32.totalorder %s25, 0
      %p199 = por %p197, %p198
      %s201 = sadd.s32 %s200, 1
      %p204 = scmp.eq.s32.totalorder %s19, 1
      %p205 = scmp.ne.s32.totalorder %s200, %s202
      %p206 = scmp.eq.s32.totalorder %s19, 0
      %p207 = por %p205, %p206
      %p208 = scmp.ne.s32.totalorder %s200, %s202
      %p209 = scmp.eq.s32.totalorder %s24, 1
      %p210 = por %p208, %p209
      %p211 = scmp.ne.s32.totalorder %s202, %s203
      %p212 = scmp.eq.s32.totalorder %s24, 0
      %p213 = por %p211, %p212
      %p214 = scmp.ne.s32.totalorder %s202, %s203
      %p215 = scmp.eq.s32.totalorder %s25, 1
      %p216 = por %p214, %p215
      %p218 = scmp.ne.s32.totalorder %s203, %s217
      %p219 = scmp.eq.s32.totalorder %s25, 0
      %p220 = por %p218, %p219
      %s221 = ssub.s32 %s19, %s26
      %p222 = scmp.eq.s32.totalorder %s221, 0
      %s224 = sadd.s32 %s223, 1
      %s225 = scalar_select %p222, %s223, %s224
      %p228 = pneg %p222
      %p229 = scmp.eq.s32.totalorder %s19, 1
      %p230 = por %p228, %p229
      %p231 = scmp.ne.s32.totalorder %s223, %s226
      %p232 = scmp.eq.s32.totalorder %s19, 0
      %p233 = por %p231, %p232
      %p234 = scmp.ne.s32.totalorder %s223, %s226
      %p235 = scmp.eq.s32.totalorder %s24, 1
      %p236 = por %p234, %p235
      %p237 = scmp.ne.s32.totalorder %s226, %s227
      %p238 = scmp.eq.s32.totalorder %s24, 0
      %p239 = por %p237, %p238
      %p240 = scmp.ne.s32.totalorder %s226, %s227
      %p241 = scmp.eq.s32.totalorder %s25, 1
      %p242 = por %p240, %p241
      %p244 = scmp.ne.s32.totalorder %s227, %s243
      %p245 = scmp.eq.s32.totalorder %s25, 0
      %p246 = por %p244, %p245
      %p247 = scmp.le.s32.totalorder 1, %s19
      %p248 = scmp.lt.s32.totalorder %s19, 3
      %p249 = pnand %p247, %p248
      %p250 = pneg %p249
      // Predicated region
      $region9: #{tpu_custom_call.1} parent=5 // pred_check
        _
      $region10: #{tpu_custom_call.1} parent=5 // pred_check_branch
        %252 = sbr.rel (%p249) target = $region12
      $region11: #{tpu_custom_call.1} parent=5 // pred_region
        %s253 = ssub.s32 %s19, 1
        // Predicated region
        $region13: #{tpu_custom_call.1} parent=11 // pred_check
          %p254 = pneg %p66
        $region14: #{tpu_custom_call.1} parent=11 // pred_check_branch
          %256 = sbr.rel (%p254) target = $region16
        $region15: #{tpu_custom_call.1} parent=11 // pred_region
          %s258 = ssub.s32 128, 128
          %259 = vsyncadd [#allocation3], %s258
          %s261 = sshll.u32 [#allocation2], 4
          %s262 = int_to_ptr.vmem [resolvable:$true] %s261
          %264 = dma.hbm_to_vmem [thread:$0]  %s1, 128, %s262, [#allocation3]
        $region16: #{tpu_custom_call.1} parent=11 // pred_fallthru
          _
        // Predicated region
        $region17: #{tpu_custom_call.1} parent=11 // pred_check
          %p265 = pneg %p87
        $region18: #{tpu_custom_call.1} parent=11 // pred_check_branch
          %267 = sbr.rel (%p265) target = $region20
        $region19: #{tpu_custom_call.1} parent=11 // pred_region
          _
        $region20: #{tpu_custom_call.1} parent=11 // pred_fallthru
          _
        // Predicated region
        $region21: #{tpu_custom_call.1} parent=11 // pred_check
          %p268 = pneg %p108
        $region22: #{tpu_custom_call.1} parent=11 // pred_check_branch
          %270 = sbr.rel (%p268) target = $region24
        $region23: #{tpu_custom_call.1} parent=11 // pred_region
          _
        $region24: #{tpu_custom_call.1} parent=11 // pred_fallthru
          _
        // Predicated region
        $region25: #{tpu_custom_call.1} parent=11 // pred_check
          %p271 = pneg %p129
        $region26: #{tpu_custom_call.1} parent=11 // pred_check_branch
          %273 = sbr.rel (%p271) target = $region28
        $region27: #{tpu_custom_call.1} parent=11 // pred_region
          _
        $region28: #{tpu_custom_call.1} parent=11 // pred_fallthru
          _
        // Predicated region
        $region29: #{tpu_custom_call.1} parent=11 // pred_check
          %p274 = pneg %p150
        $region30: #{tpu_custom_call.1} parent=11 // pred_check_branch
          %276 = sbr.rel (%p274) target = $region32
        $region31: #{tpu_custom_call.1} parent=11 // pred_region
          _
        $region32: #{tpu_custom_call.1} parent=11 // pred_fallthru
          _
        // Predicated region
        $region33: #{tpu_custom_call.1} parent=11 // pred_check
          %p277 = pneg %p171
        $region34: #{tpu_custom_call.1} parent=11 // pred_check_branch
          %279 = sbr.rel (%p277) target = $region36
        $region35: #{tpu_custom_call.1} parent=11 // pred_region
          _
        $region36: #{tpu_custom_call.1} parent=11 // pred_fallthru
          _
        // Predicated region
        $region37: #{tpu_custom_call.1} parent=11 // pred_check
          %p280 = pneg %p192
        $region38: #{tpu_custom_call.1} parent=11 // pred_check_branch
          %282 = sbr.rel (%p280) target = $region40
        $region39: #{tpu_custom_call.1} parent=11 // pred_region
          _
        $region40: #{tpu_custom_call.1} parent=11 // pred_fallthru
          _
        // Predicated region
        $region41: #{tpu_custom_call.1} parent=11 // pred_check
          %p283 = pneg %p213
        $region42: #{tpu_custom_call.1} parent=11 // pred_check_branch
          %285 = sbr.rel (%p283) target = $region44
        $region43: #{tpu_custom_call.1} parent=11 // pred_region
          _
        $region44: #{tpu_custom_call.1} parent=11 // pred_fallthru
          _
      $region12: #{tpu_custom_call.1} parent=5 // pred_fallthru
        _
      %p286 = scmp.lt.s32.totalorder %s19, 2
      // Predicated region
      $region45: #{tpu_custom_call.1} parent=5 // pred_check
        %p287 = pneg %p286
      $region46: #{tpu_custom_call.1} parent=5 // pred_check_branch
        %289 = sbr.rel (%p287) target = $region48
      $region47: #{tpu_custom_call.1} parent=5 // pred_region
        // Predicated region
        $region49: #{tpu_custom_call.1} parent=47 // pred_check
          %p290 = pneg %p39
        $region50: #{tpu_custom_call.1} parent=47 // pred_check_branch
          %292 = sbr.rel (%p290) target = $region52
        $region51: #{tpu_custom_call.1} parent=47 // pred_region
          %p293 = scmp.lt.s32.totalorder %s19, 1
          %s294 = scalar_select %p293, %s19, 1
          %s295 = smul.addr %s294, 2
          %s296 = smul.addr %s295, 8
          %s297 = scalar_lea.vmem %s0, %s296
        $region52: #{tpu_custom_call.1} parent=47 // pred_fallthru
          _
      $region48: #{tpu_custom_call.1} parent=5 // pred_fallthru
        _
      %p298 = scmp.le.s32.totalorder 1, %s19
      %p299 = scmp.lt.s32.totalorder %s19, 3
      %p300 = pnand %p298, %p299
      %p301 = pneg %p300
      // Predicated region
      $region53: #{tpu_custom_call.1} parent=5 // pred_check
        _
      $region54: #{tpu_custom_call.1} parent=5 // pred_check_branch
        %303 = sbr.rel (%p300) target = $region56
      $region55: #{tpu_custom_call.1} parent=5 // pred_region
        %s304 = ssub.s32 %s19, 1
        // Predicated region
        $region57: #{tpu_custom_call.1} parent=55 // pred_check
          %p305 = pneg %p66
        $region58: #{tpu_custom_call.1} parent=55 // pred_check_branch
          %307 = sbr.rel (%p305) target = $region60
        $region59: #{tpu_custom_call.1} parent=55 // pred_region
          %308 = dma.done [#allocation3], 128
        $region60: #{tpu_custom_call.1} parent=55 // pred_fallthru
          _
        %p309 = scmp.lt.s32.totalorder %s24, 1
        %s310 = scalar_select %p309, %s24, 1
        %s311 = smul.addr %s310, 2
        %s312 = smul.addr %s311, 8
        %s313 = scalar_lea.vmem %s0, %s312
        %p314 = pneg %p45
        %p315 = pneg %p42
        %p316 = pneg %p66
        %p317 = pneg %p63
        %p318 = pneg %p87
        %p319 = pneg %p84
        %p320 = pneg %p108
        %p321 = pneg %p105
        %p322 = pneg %p129
        %p323 = pneg %p126
        %p324 = pneg %p150
        %p325 = pneg %p147
        %p326 = pneg %p171
        %p327 = pneg %p168
        %p328 = pneg %p192
        %p329 = pneg %p189
        %p330 = pneg %p213
        %p331 = pneg %p210
        %p332 = pneg %p239
        %p333 = pneg %p236
        %s334 = sand.u32 %s226, 1
        %s335 = scalar_lea.sflag [#allocation4], %s334
        %s336 = sand.u32 %s226, 1
        %s337 = smul.addr %s336, 16
        %s338 = scalar_lea.vmem [#allocation5], %s337
        %p339 = scmp.lt.s32.totalorder %s24, 1
        %s340 = scalar_select %p339, %s24, 1
        %s341 = smul.addr %s340, 2
        %s342 = smul.addr %s341, 8
        %s343 = scalar_lea.vmem %s0, %s342
        %v344 = vlaneseq
        %v345 = vand.u32 %v344, 127
        %v346 = vadd.s32 %v345, 128
        %v347 = vcvt.s32.f32 %v345
        %v348 = vcvt.s32.f32 %v346
        %v349 = vrcp.pop 16.0
        %v350 = vmul.f32 %v347, %v349
        %v351 = vmul.f32 %v348, %v349
        %v352 = vfloor.f32 %v350
        %v353 = vfloor.f32 %v351
        %v354 = vmul.f32 %v352, 16.0
        %v355 = vmul.f32 %v353, 16.0
        %v356 = vsub.f32 %v347, %v354
        %v357 = vsub.f32 %v348, %v355
        %v358 = vadd.f32 %v352, -1.0
        %v359 = vadd.f32 %v353, -1.0
        %vm360 = vcmp.ge.f32.partialorder %v358, 0.0
        %vm361 = vcmp.ge.f32.partialorder %v359, 0.0
        %vm362 = vcmp.le.f32.partialorder %v358, 15.0
        %vm363 = vcmp.le.f32.partialorder %v359, 15.0
        %vm364 = vmand %vm360, %vm362
        %vm365 = vmand %vm361, %vm363
        %v366 = vadd.f32 %v356, -1.0
        %v367 = vadd.f32 %v357, -1.0
        %vm368 = vcmp.ge.f32.partialorder %v366, 0.0
        %vm369 = vcmp.ge.f32.partialorder %v367, 0.0
        %vm370 = vmand %vm364, %vm368
        %vm371 = vmand %vm365, %vm369
        %vm372 = vcmp.le.f32.partialorder %v366, 15.0
        %vm373 = vcmp.le.f32.partialorder %v367, 15.0
        %vm374 = vmand %vm370, %vm372
        %vm375 = vmand %vm371, %vm373
        %v376 = vadd.f32 %v356, 0.0
        %v377 = vadd.f32 %v357, 0.0
        %vm378 = vcmp.ge.f32.partialorder %v376, 0.0
        %vm379 = vcmp.ge.f32.partialorder %v377, 0.0
        %vm380 = vmand %vm364, %vm378
        %vm381 = vmand %vm365, %vm379
        %vm382 = vcmp.le.f32.partialorder %v376, 15.0
        %vm383 = vcmp.le.f32.partialorder %v377, 15.0
        %vm384 = vmand %vm380, %vm382
        %vm385 = vmand %vm381, %vm383
        %v386 = vadd.f32 %v356, 1.0
        %v387 = vadd.f32 %v357, 1.0
        %vm388 = vcmp.ge.f32.partialorder %v386, 0.0
        %vm389 = vcmp.ge.f32.partialorder %v387, 0.0
        %vm390 = vmand %vm364, %vm388
        %vm391 = vmand %vm365, %vm389
        %vm392 = vcmp.le.f32.partialorder %v386, 15.0
        %vm393 = vcmp.le.f32.partialorder %v387, 15.0
        %vm394 = vmand %vm390, %vm392
        %vm395 = vmand %vm391, %vm393
        %v396 = vadd.f32 %v352, 0.0
        %v397 = vadd.f32 %v353, 0.0
        %vm398 = vcmp.ge.f32.partialorder %v396, 0.0
        %vm399 = vcmp.ge.f32.partialorder %v397, 0.0
        %vm400 = vcmp.le.f32.partialorder %v396, 15.0
        %vm401 = vcmp.le.f32.partialorder %v397, 15.0
        %vm402 = vmand %vm398, %vm400
        %vm403 = vmand %vm399, %vm401
        %vm404 = vmand %vm402, %vm368
        %vm405 = vmand %vm403, %vm369
        %vm406 = vmand %vm404, %vm372
        %vm407 = vmand %vm405, %vm373
        %vm408 = vmand %vm402, %vm378
        %vm409 = vmand %vm403, %vm379
        %vm410 = vmand %vm408, %vm382
        %vm411 = vmand %vm409, %vm383
        %vm412 = vmand %vm402, %vm388
        %vm413 = vmand %vm403, %vm389
        %vm414 = vmand %vm412, %vm392
        %vm415 = vmand %vm413, %vm393
        %v416 = vadd.f32 %v352, 1.0
        %v417 = vadd.f32 %v353, 1.0
        %vm418 = vcmp.ge.f32.partialorder %v416, 0.0
        %vm419 = vcmp.ge.f32.partialorder %v417, 0.0
        %vm420 = vcmp.le.f32.partialorder %v416, 15.0
        %vm421 = vcmp.le.f32.partialorder %v417, 15.0
        %vm422 = vmand %vm418, %vm420
        %vm423 = vmand %vm419, %vm421
        %vm424 = vmand %vm422, %vm368
        %vm425 = vmand %vm423, %vm369
        %vm426 = vmand %vm424, %vm372
        %vm427 = vmand %vm425, %vm373
        %vm428 = vmand %vm422, %vm378
        %vm429 = vmand %vm423, %vm379
        %vm430 = vmand %vm428, %vm382
        %vm431 = vmand %vm429, %vm383
        %vm432 = vmand %vm422, %vm388
        %vm433 = vmand %vm423, %vm389
        %vm434 = vmand %vm432, %vm392
        %vm435 = vmand %vm433, %vm393
        %v436 = vld [vmem:[%s343] sm:$0xff]
        %v437 = vld [vmem:[%s343 + $0x8] sm:$0xff]
        %438 = vrot.lane.b32.xlu0 %v436, 17
        %v439 = vpop.permute.xlu0 %438
        %440 = vrot.lane.b32.xlu0 %v437, 17
        %v441 = vpop.permute.xlu0 %440
        %vm442 = vcmp.lt.s32.totalorder %v345, 17
        %v443 = vsel %vm442, %v439, %v441
        %v444 = vsel %vm442, %v441, %v439
        %v445 = vsel %vm374, %v444, 0.0
        %v446 = vsel %vm375, %v443, 0.0
        %447 = vrot.lane.b32.xlu0 %v436, 16
        %v448 = vpop.permute.xlu0 %447
        %449 = vrot.lane.b32.xlu0 %v437, 16
        %v450 = vpop.permute.xlu0 %449
        %vm451 = vcmp.lt.s32.totalorder %v345, 16
        %v452 = vsel %vm451, %v448, %v450
        %v453 = vsel %vm451, %v450, %v448
        %v454 = vsel %vm384, %v453, 0.0
        %v455 = vsel %vm385, %v452, 0.0
        %456 = vrot.lane.b32.xlu0 %v436, 15
        %v457 = vpop.permute.xlu0 %456
        %458 = vrot.lane.b32.xlu0 %v437, 15
        %v459 = vpop.permute.xlu0 %458
        %vm460 = vcmp.lt.s32.totalorder %v345, 15
        %v461 = vsel %vm460, %v457, %v459
        %v462 = vsel %vm460, %v459, %v457
        %v463 = vsel %vm394, %v462, 0.0
        %v464 = vsel %vm395, %v461, 0.0
        %465 = vrot.lane.b32.xlu0 %v436, 1
        %v466 = vpop.permute.xlu0 %465
        %467 = vrot.lane.b32.xlu0 %v437, 1
        %v468 = vpop.permute.xlu0 %467
        %vm469 = vcmp.lt.s32.totalorder %v345, 1
        %v470 = vsel %vm469, %v466, %v468
        %v471 = vsel %vm469, %v468, %v466
        %v472 = vsel %vm406, %v471, 0.0
        %v473 = vsel %vm407, %v470, 0.0
        %v474 = vsel %vm410, %v436, 0.0
        %v475 = vsel %vm411, %v437, 0.0
        %476 = vrot.lane.b32.xlu0 %v436, 127
        %v477 = vpop.permute.xlu0 %476
        %478 = vrot.lane.b32.xlu0 %v437, 127
        %v479 = vpop.permute.xlu0 %478
        %vm480 = vcmp.lt.s32.totalorder %v345, 127
        %v481 = vsel %vm480, %v477, %v479
        %v482 = vsel %vm480, %v479, %v477
        %v483 = vsel %vm414, %v481, 0.0
        %v484 = vsel %vm415, %v482, 0.0
        %485 = vrot.lane.b32.xlu0 %v436, 113
        %v486 = vpop.permute.xlu0 %485
        %487 = vrot.lane.b32.xlu0 %v437, 113
        %v488 = vpop.permute.xlu0 %487
        %vm489 = vcmp.lt.s32.totalorder %v345, 113
        %v490 = vsel %vm489, %v486, %v488
        %v491 = vsel %vm489, %v488, %v486
        %v492 = vsel %vm426, %v490, 0.0
        %v493 = vsel %vm427, %v491, 0.0
        %494 = vrot.lane.b32.xlu0 %v436, 112
        %v495 = vpop.permute.xlu0 %494
        %496 = vrot.lane.b32.xlu0 %v437, 112
        %v497 = vpop.permute.xlu0 %496
        %vm498 = vcmp.lt.s32.totalorder %v345, 112
        %v499 = vsel %vm498, %v495, %v497
        %v500 = vsel %vm498, %v497, %v495
        %v501 = vsel %vm430, %v499, 0.0
        %v502 = vsel %vm431, %v500, 0.0
        %503 = vrot.lane.b32.xlu0 %v436, 111
        %v504 = vpop.permute.xlu0 %503
        %505 = vrot.lane.b32.xlu0 %v437, 111
        %v506 = vpop.permute.xlu0 %505
        %vm507 = vcmp.lt.s32.totalorder %v345, 111
        %v508 = vsel %vm507, %v504, %v506
        %v509 = vsel %vm507, %v506, %v504
        %v510 = vsel %vm434, %v508, 0.0
        %v511 = vsel %vm435, %v509, 0.0
        %v512 = vld [vmem:[#allocation2] sm:$0xff]
        %v513 = vld [vmem:[%s2] sm:$0xff]
        %515 = vset.pattern.permute.xlu0 0
        %516 = vperm.xlu0 %515, %v513
        %v517 = vpop.permute.xlu0 %516
        %vm519 = vcmask 588800
        %v521 = vsel %vm519, %v512, 0
        %523 = vmatprep.subr.mxu0 %v446
        %524 = vmatpush1.msra.mxu0 %v445
        %525 = vmatprep.subr.mxu0 %v455
        %526 = vmatpush1.msra.mxu0 %v454
        %527 = vmatprep.subr.mxu0 %v464
        %528 = vmatpush1.msra.mxu0 %v463
        %529 = vmatprep.subr.mxu0 %v473
        %530 = vmatpush1.msra.mxu0 %v472
        %531 = vmatprep.subr.mxu0 %v475
        %532 = vmatpush1.msra.mxu0 %v474
        %533 = vmatprep.subr.mxu0 %v484
        %534 = vmatpush1.msra.mxu0 %v483
        %535 = vmatprep.subr.mxu0 %v493
        %536 = vmatpush1.msra.mxu0 %v492
        %537 = vmatprep.subr.mxu0 %v502
        %538 = vmatpush1.msra.mxu0 %v501
        %539 = vmatprep.subr.mxu0 %v511
        %540 = vmatpush1.msra.mxu0 %v510
        %541 = vmatprep.subr.mxu0 0.0
        %542 = vmatpush1.msra.mxu0 0.0
        %543 = vmatprep.subr.mxu0 0.0
        %544 = vmatpush1.msra.mxu0 0.0
        %545 = vmatprep.subr.mxu0 0.0
        %546 = vmatpush1.msra.mxu0 0.0
        %547 = vmatprep.subr.mxu0 0.0
        %548 = vmatpush1.msra.mxu0 0.0
        %549 = vmatprep.subr.mxu0 0.0
        %550 = vmatpush1.msra.mxu0 0.0
        %551 = vmatprep.subr.mxu0 0.0
        %552 = vmatpush1.msra.mxu0 0.0
        %553 = vmatprep.subr.mxu0 0.0
        %554 = vmatpush1.msra.mxu0 0.0
        %555 = vmatprep.subr.mxu0 0.0
        %556 = vmatpush1.msra.mxu0 0.0
        %557 = vmatprep.subr.mxu0 0.0
        %558 = vmatpush1.msra.mxu0 0.0
        %559 = vmatprep.subr.mxu0 0.0
        %560 = vmatpush1.msra.mxu0 0.0
        %561 = vmatprep.subr.mxu0 0.0
        %562 = vmatpush1.msra.mxu0 0.0
        %563 = vmatprep.subr.mxu0 0.0
        %564 = vmatpush1.msra.mxu0 0.0
        %565 = vmatprep.subr.mxu0 0.0
        %566 = vmatpush1.msra.mxu0 0.0
        %567 = vmatprep.subr.mxu0 0.0
        %568 = vmatpush1.msra.mxu0 0.0
        %569 = vmatprep.subr.mxu0 0.0
        %570 = vmatpush1.msra.mxu0 0.0
        %571 = vmatprep.subr.mxu0 0.0
        %572 = vmatpush1.msra.mxu0 0.0
        %573 = vmatprep.subr.mxu0 0.0
        %574 = vmatpush1.msra.mxu0 0.0
        %575 = vmatprep.subr.mxu0 0.0
        %576 = vmatpush1.msra.mxu0 0.0
        %577 = vmatprep.subr.mxu0 0.0
        %578 = vmatpush1.msra.mxu0 0.0
        %579 = vmatprep.subr.mxu0 0.0
        %580 = vmatpush1.msra.mxu0 0.0
        %581 = vmatprep.subr.mxu0 0.0
        %582 = vmatpush1.msra.mxu0 0.0
        %583 = vmatprep.subr.mxu0 0.0
        %584 = vmatpush1.msra.mxu0 0.0
        %585 = vmatprep.subr.mxu0 0.0
        %586 = vmatpush1.msra.mxu0 0.0
        %587 = vmatprep.mubr.f32.mxu0 0.0
        %588 = vmatmul.mubr.f32.gmra.mrb[0].mxu0 %v521
        %v589 = vpop.f32.mrb[0].mxu0
        %v590 = vadd.f32 %v517, %v589
        %v591 = vpop.f32.mrb[0].mxu0
        %v592 = vadd.f32 %v517, %v591
        %593 = vdwg.mxu0
        %v594 = vmul.f32 %v590, 0.5
        %v595 = vmul.f32 %v592, 0.5
        %v596 = vmul.f32 %v590, 0.70710677
        %v597 = vmul.f32 %v592, 0.70710677
        %vm598 = vcmp.ge.f32.partialorder %v596, 0.0
        %vm599 = vcmp.ge.f32.partialorder %v597, 0.0
        %v600 = vsel %vm598, 1.0, -1.0
        %v601 = vsel %vm599, 1.0, -1.0
        %v602 = vand.u32 2147483647, %v596
        %v603 = vand.u32 2147483647, %v597
        %v604 = vmul.f32 %v602, 0.3275911
        %v605 = vmul.f32 %v603, 0.3275911
        %v606 = vadd.f32 %v604, 1.0
        %v607 = vadd.f32 %v605, 1.0
        %v608 = vrcp.pop %v606
        %v609 = vrcp.pop %v607
        %v610 = vmul.f32 %v608, 1.0614054
        %v611 = vmul.f32 %v609, 1.0614054
        %v612 = vadd.f32 %v610, -1.4531521
        %v613 = vadd.f32 %v611, -1.4531521
        %v614 = vmul.f32 %v612, %v608
        %v615 = vmul.f32 %v613, %v609
        %v616 = vadd.f32 %v614, 1.4214138
        %v617 = vadd.f32 %v615, 1.4214138
        %v618 = vmul.f32 %v616, %v608
        %v619 = vmul.f32 %v617, %v609
        %v620 = vadd.f32 %v618, -0.28449672
        %v621 = vadd.f32 %v619, -0.28449672
        %v622 = vmul.f32 %v620, %v608
        %v623 = vmul.f32 %v621, %v609
        %v624 = vadd.f32 %v622, 0.2548296
        %v625 = vadd.f32 %v623, 0.2548296
        %v626 = vmul.f32 %v624, %v608
        %v627 = vmul.f32 %v625, %v609
        %v628 = vsub.f32 0.0, %v602
        %v629 = vsub.f32 0.0, %v603
        %v630 = vmul.f32 %v628, %v602
        %v631 = vmul.f32 %v629, %v603
        %v632 = vmul.f32 %v630, 1.442695
        %v633 = vpow.pop %v632
        %v634 = vmul.f32 %v631, 1.442695
        %v635 = vpow.pop %v634
        %v636 = vmul.f32 %v626, %v633
        %v637 = vmul.f32 %v627, %v635
        %v638 = vsub.f32 1.0, %v636
        %v639 = vsub.f32 1.0, %v637
        %v640 = vmul.f32 %v600, %v638
        %v641 = vmul.f32 %v601, %v639
        %v642 = vadd.f32 %v640, 1.0
        %v643 = vadd.f32 %v641, 1.0
        %v644 = vmul.f32 %v594, %v642
        %v645 = vmul.f32 %v595, %v643
        %646 = vrot.lane.b32.xlu0 %v644, 17
        %v647 = vpop.permute.xlu0 %646
        %648 = vrot.lane.b32.xlu0 %v645, 17
        %v649 = vpop.permute.xlu0 %648
        %v650 = vsel %vm442, %v647, %v649
        %v651 = vsel %vm442, %v649, %v647
        %v652 = vsel %vm374, %v651, 0.0
        %v653 = vsel %vm375, %v650, 0.0
        %654 = vrot.lane.b32.xlu0 %v644, 16
        %v655 = vpop.permute.xlu0 %654
        %656 = vrot.lane.b32.xlu0 %v645, 16
        %v657 = vpop.permute.xlu0 %656
        %v658 = vsel %vm451, %v655, %v657
        %v659 = vsel %vm451, %v657, %v655
        %v660 = vsel %vm384, %v659, 0.0
        %v661 = vsel %vm385, %v658, 0.0
        %662 = vrot.lane.b32.xlu0 %v644, 15
        %v663 = vpop.permute.xlu0 %662
        %664 = vrot.lane.b32.xlu0 %v645, 15
        %v665 = vpop.permute.xlu0 %664
        %v666 = vsel %vm460, %v663, %v665
        %v667 = vsel %vm460, %v665, %v663
        %v668 = vsel %vm394, %v667, 0.0
        %v669 = vsel %vm395, %v666, 0.0
        %670 = vrot.lane.b32.xlu0 %v644, 1
        %v671 = vpop.permute.xlu0 %670
        %672 = vrot.lane.b32.xlu0 %v645, 1
        %v673 = vpop.permute.xlu0 %672
        %v674 = vsel %vm469, %v671, %v673
        %v675 = vsel %vm469, %v673, %v671
        %v676 = vsel %vm406, %v675, 0.0
        %v677 = vsel %vm407, %v674, 0.0
        %v678 = vsel %vm410, %v644, 0.0
        %v679 = vsel %vm411, %v645, 0.0
        %680 = vrot.lane.b32.xlu0 %v644, 127
        %v681 = vpop.permute.xlu0 %680
        %682 = vrot.lane.b32.xlu0 %v645, 127
        %v683 = vpop.permute.xlu0 %682
        %v684 = vsel %vm480, %v681, %v683
        %v685 = vsel %vm480, %v683, %v681
        %v686 = vsel %vm414, %v684, 0.0
        %v687 = vsel %vm415, %v685, 0.0
        %688 = vrot.lane.b32.xlu0 %v644, 113
        %v689 = vpop.permute.xlu0 %688
        %690 = vrot.lane.b32.xlu0 %v645, 113
        %v691 = vpop.permute.xlu0 %690
        %v692 = vsel %vm489, %v689, %v691
        %v693 = vsel %vm489, %v691, %v689
        %v694 = vsel %vm426, %v692, 0.0
        %v695 = vsel %vm427, %v693, 0.0
        %696 = vrot.lane.b32.xlu0 %v644, 112
        %v697 = vpop.permute.xlu0 %696
        %698 = vrot.lane.b32.xlu0 %v645, 112
        %v699 = vpop.permute.xlu0 %698
        %v700 = vsel %vm498, %v697, %v699
        %v701 = vsel %vm498, %v699, %v697
        %v702 = vsel %vm430, %v700, 0.0
        %v703 = vsel %vm431, %v701, 0.0
        %704 = vrot.lane.b32.xlu0 %v644, 111
        %v705 = vpop.permute.xlu0 %704
        %706 = vrot.lane.b32.xlu0 %v645, 111
        %v707 = vpop.permute.xlu0 %706
        %v708 = vsel %vm507, %v705, %v707
        %v709 = vsel %vm507, %v707, %v705
        %v710 = vsel %vm434, %v708, 0.0
        %v711 = vsel %vm435, %v709, 0.0
        %v712 = vld [vmem:[%s3] sm:$0xff]
        %v713 = vld [vmem:[%s4] sm:$0xff]
        %715 = vset.pattern.permute.xlu0 0
        %716 = vperm.xlu0 %715, %v713
        %v717 = vpop.permute.xlu0 %716
        %v720 = vsel %vm519, %v712, 0
        %722 = vmatprep.subr.mxu0 %v653
        %723 = vmatpush1.msra.mxu0 %v652
        %724 = vmatprep.subr.mxu0 %v661
        %725 = vmatpush1.msra.mxu0 %v660
        %726 = vmatprep.subr.mxu0 %v669
        %727 = vmatpush1.msra.mxu0 %v668
        %728 = vmatprep.subr.mxu0 %v677
        %729 = vmatpush1.msra.mxu0 %v676
        %730 = vmatprep.subr.mxu0 %v679
        %731 = vmatpush1.msra.mxu0 %v678
        %732 = vmatprep.subr.mxu0 %v687
        %733 = vmatpush1.msra.mxu0 %v686
        %734 = vmatprep.subr.mxu0 %v695
        %735 = vmatpush1.msra.mxu0 %v694
        %736 = vmatprep.subr.mxu0 %v703
        %737 = vmatpush1.msra.mxu0 %v702
        %738 = vmatprep.subr.mxu0 %v711
        %739 = vmatpush1.msra.mxu0 %v710
        %740 = vmatprep.subr.mxu0 0.0
        %741 = vmatpush1.msra.mxu0 0.0
        %742 = vmatprep.subr.mxu0 0.0
        %743 = vmatpush1.msra.mxu0 0.0
        %744 = vmatprep.subr.mxu0 0.0
        %745 = vmatpush1.msra.mxu0 0.0
        %746 = vmatprep.subr.mxu0 0.0
        %747 = vmatpush1.msra.mxu0 0.0
        %748 = vmatprep.subr.mxu0 0.0
        %749 = vmatpush1.msra.mxu0 0.0
        %750 = vmatprep.subr.mxu0 0.0
        %751 = vmatpush1.msra.mxu0 0.0
        %752 = vmatprep.subr.mxu0 0.0
        %753 = vmatpush1.msra.mxu0 0.0
        %754 = vmatprep.subr.mxu0 0.0
        %755 = vmatpush1.msra.mxu0 0.0
        %756 = vmatprep.subr.mxu0 0.0
        %757 = vmatpush1.msra.mxu0 0.0
        %758 = vmatprep.subr.mxu0 0.0
        %759 = vmatpush1.msra.mxu0 0.0
        %760 = vmatprep.subr.mxu0 0.0
        %761 = vmatpush1.msra.mxu0 0.0
        %762 = vmatprep.subr.mxu0 0.0
        %763 = vmatpush1.msra.mxu0 0.0
        %764 = vmatprep.subr.mxu0 0.0
        %765 = vmatpush1.msra.mxu0 0.0
        %766 = vmatprep.subr.mxu0 0.0
        %767 = vmatpush1.msra.mxu0 0.0
        %768 = vmatprep.subr.mxu0 0.0
        %769 = vmatpush1.msra.mxu0 0.0
        %770 = vmatprep.subr.mxu0 0.0
        %771 = vmatpush1.msra.mxu0 0.0
        %772 = vmatprep.subr.mxu0 0.0
        %773 = vmatpush1.msra.mxu0 0.0
        %774 = vmatprep.subr.mxu0 0.0
        %775 = vmatpush1.msra.mxu0 0.0
        %776 = vmatprep.subr.mxu0 0.0
        %777 = vmatpush1.msra.mxu0 0.0
        %778 = vmatprep.subr.mxu0 0.0
        %779 = vmatpush1.msra.mxu0 0.0
        %780 = vmatprep.subr.mxu0 0.0
        %781 = vmatpush1.msra.mxu0 0.0
        %782 = vmatprep.subr.mxu0 0.0
        %783 = vmatpush1.msra.mxu0 0.0
        %784 = vmatprep.subr.mxu0 0.0
        %785 = vmatpush1.msra.mxu0 0.0
        %786 = vmatprep.mubr.f32.mxu0 0.0
        %787 = vmatmul.mubr.f32.gmra.mrb[0].mxu0 %v720
        %v788 = vpop.f32.mrb[0].mxu0
        %v789 = vadd.f32 %v717, %v788
        %v790 = vpop.f32.mrb[0].mxu0
        %v791 = vadd.f32 %v717, %v790
        %792 = vdwg.mxu0
        %v793 = vmul.f32 %v789, 0.5
        %v794 = vmul.f32 %v791, 0.5
        %v795 = vmul.f32 %v789, 0.70710677
        %v796 = vmul.f32 %v791, 0.70710677
        %vm797 = vcmp.ge.f32.partialorder %v795, 0.0
        %vm798 = vcmp.ge.f32.partialorder %v796, 0.0
        %v799 = vsel %vm797, 1.0, -1.0
        %v800 = vsel %vm798, 1.0, -1.0
        %v801 = vand.u32 2147483647, %v795
        %v802 = vand.u32 2147483647, %v796
        %v803 = vmul.f32 %v801, 0.3275911
        %v804 = vmul.f32 %v802, 0.3275911
        %v805 = vadd.f32 %v803, 1.0
        %v806 = vadd.f32 %v804, 1.0
        %v807 = vrcp.pop %v805
        %v808 = vrcp.pop %v806
        %v809 = vmul.f32 %v807, 1.0614054
        %v810 = vmul.f32 %v808, 1.0614054
        %v811 = vadd.f32 %v809, -1.4531521
        %v812 = vadd.f32 %v810, -1.4531521
        %v813 = vmul.f32 %v811, %v807
        %v814 = vmul.f32 %v812, %v808
        %v815 = vadd.f32 %v813, 1.4214138
        %v816 = vadd.f32 %v814, 1.4214138
        %v817 = vmul.f32 %v815, %v807
        %v818 = vmul.f32 %v816, %v808
        %v819 = vadd.f32 %v817, -0.28449672
        %v820 = vadd.f32 %v818, -0.28449672
        %v821 = vmul.f32 %v819, %v807
        %v822 = vmul.f32 %v820, %v808
        %v823 = vadd.f32 %v821, 0.2548296
        %v824 = vadd.f32 %v822, 0.2548296
        %v825 = vmul.f32 %v823, %v807
        %v826 = vmul.f32 %v824, %v808
        %v827 = vsub.f32 0.0, %v801
        %v828 = vsub.f32 0.0, %v802
        %v829 = vmul.f32 %v827, %v801
        %v830 = vmul.f32 %v828, %v802
        %v831 = vmul.f32 %v829, 1.442695
        %v832 = vpow.pop %v831
        %v833 = vmul.f32 %v830, 1.442695
        %v834 = vpow.pop %v833
        %v835 = vmul.f32 %v825, %v832
        %v836 = vmul.f32 %v826, %v834
        %v837 = vsub.f32 1.0, %v835
        %v838 = vsub.f32 1.0, %v836
        %v839 = vmul.f32 %v799, %v837
        %v840 = vmul.f32 %v800, %v838
        %v841 = vadd.f32 %v839, 1.0
        %v842 = vadd.f32 %v840, 1.0
        %v843 = vmul.f32 %v793, %v841
        %v844 = vmul.f32 %v794, %v842
        %845 = vrot.lane.b32.xlu0 %v843, 17
        %v846 = vpop.permute.xlu0 %845
        %847 = vrot.lane.b32.xlu0 %v844, 17
        %v848 = vpop.permute.xlu0 %847
        %v849 = vsel %vm442, %v846, %v848
        %v850 = vsel %vm442, %v848, %v846
        %v851 = vsel %vm374, %v850, 0.0
        %v852 = vsel %vm375, %v849, 0.0
        %853 = vrot.lane.b32.xlu0 %v843, 16
        %v854 = vpop.permute.xlu0 %853
        %855 = vrot.lane.b32.xlu0 %v844, 16
        %v856 = vpop.permute.xlu0 %855
        %v857 = vsel %vm451, %v854, %v856
        %v858 = vsel %vm451, %v856, %v854
        %v859 = vsel %vm384, %v858, 0.0
        %v860 = vsel %vm385, %v857, 0.0
        %861 = vrot.lane.b32.xlu0 %v843, 15
        %v862 = vpop.permute.xlu0 %861
        %863 = vrot.lane.b32.xlu0 %v844, 15
        %v864 = vpop.permute.xlu0 %863
        %v865 = vsel %vm460, %v862, %v864
        %v866 = vsel %vm460, %v864, %v862
        %v867 = vsel %vm394, %v866, 0.0
        %v868 = vsel %vm395, %v865, 0.0
        %869 = vrot.lane.b32.xlu0 %v843, 1
        %v870 = vpop.permute.xlu0 %869
        %871 = vrot.lane.b32.xlu0 %v844, 1
        %v872 = vpop.permute.xlu0 %871
        %v873 = vsel %vm469, %v870, %v872
        %v874 = vsel %vm469, %v872, %v870
        %v875 = vsel %vm406, %v874, 0.0
        %v876 = vsel %vm407, %v873, 0.0
        %v877 = vsel %vm410, %v843, 0.0
        %v878 = vsel %vm411, %v844, 0.0
        %879 = vrot.lane.b32.xlu0 %v843, 127
        %v880 = vpop.permute.xlu0 %879
        %881 = vrot.lane.b32.xlu0 %v844, 127
        %v882 = vpop.permute.xlu0 %881
        %v883 = vsel %vm480, %v880, %v882
        %v884 = vsel %vm480, %v882, %v880
        %v885 = vsel %vm414, %v883, 0.0
        %v886 = vsel %vm415, %v884, 0.0
        %887 = vrot.lane.b32.xlu0 %v843, 113
        %v888 = vpop.permute.xlu0 %887
        %889 = vrot.lane.b32.xlu0 %v844, 113
        %v890 = vpop.permute.xlu0 %889
        %v891 = vsel %vm489, %v888, %v890
        %v892 = vsel %vm489, %v890, %v888
        %v893 = vsel %vm426, %v891, 0.0
        %v894 = vsel %vm427, %v892, 0.0
        %895 = vrot.lane.b32.xlu0 %v843, 112
        %v896 = vpop.permute.xlu0 %895
        %897 = vrot.lane.b32.xlu0 %v844, 112
        %v898 = vpop.permute.xlu0 %897
        %v899 = vsel %vm498, %v896, %v898
        %v900 = vsel %vm498, %v898, %v896
        %v901 = vsel %vm430, %v899, 0.0
        %v902 = vsel %vm431, %v900, 0.0
        %903 = vrot.lane.b32.xlu0 %v843, 111
        %v904 = vpop.permute.xlu0 %903
        %905 = vrot.lane.b32.xlu0 %v844, 111
        %v906 = vpop.permute.xlu0 %905
        %v907 = vsel %vm507, %v904, %v906
        %v908 = vsel %vm507, %v906, %v904
        %v909 = vsel %vm434, %v907, 0.0
        %v910 = vsel %vm435, %v908, 0.0
        %v911 = vld [vmem:[%s5] sm:$0xff]
        %v912 = vld [vmem:[%s6] sm:$0xff]
        %914 = vset.pattern.permute.xlu0 0
        %915 = vperm.xlu0 %914, %v912
        %v916 = vpop.permute.xlu0 %915
        %v919 = vsel %vm519, %v911, 0
        %921 = vmatprep.subr.mxu0 %v852
        %922 = vmatpush1.msra.mxu0 %v851
        %923 = vmatprep.subr.mxu0 %v860
        %924 = vmatpush1.msra.mxu0 %v859
        %925 = vmatprep.subr.mxu0 %v868
        %926 = vmatpush1.msra.mxu0 %v867
        %927 = vmatprep.subr.mxu0 %v876
        %928 = vmatpush1.msra.mxu0 %v875
        %929 = vmatprep.subr.mxu0 %v878
        %930 = vmatpush1.msra.mxu0 %v877
        %931 = vmatprep.subr.mxu0 %v886
        %932 = vmatpush1.msra.mxu0 %v885
        %933 = vmatprep.subr.mxu0 %v894
        %934 = vmatpush1.msra.mxu0 %v893
        %935 = vmatprep.subr.mxu0 %v902
        %936 = vmatpush1.msra.mxu0 %v901
        %937 = vmatprep.subr.mxu0 %v910
        %938 = vmatpush1.msra.mxu0 %v909
        %939 = vmatprep.subr.mxu0 0.0
        %940 = vmatpush1.msra.mxu0 0.0
        %941 = vmatprep.subr.mxu0 0.0
        %942 = vmatpush1.msra.mxu0 0.0
        %943 = vmatprep.subr.mxu0 0.0
        %944 = vmatpush1.msra.mxu0 0.0
        %945 = vmatprep.subr.mxu0 0.0
        %946 = vmatpush1.msra.mxu0 0.0
        %947 = vmatprep.subr.mxu0 0.0
        %948 = vmatpush1.msra.mxu0 0.0
        %949 = vmatprep.subr.mxu0 0.0
        %950 = vmatpush1.msra.mxu0 0.0
        %951 = vmatprep.subr.mxu0 0.0
        %952 = vmatpush1.msra.mxu0 0.0
        %953 = vmatprep.subr.mxu0 0.0
        %954 = vmatpush1.msra.mxu0 0.0
        %955 = vmatprep.subr.mxu0 0.0
        %956 = vmatpush1.msra.mxu0 0.0
        %957 = vmatprep.subr.mxu0 0.0
        %958 = vmatpush1.msra.mxu0 0.0
        %959 = vmatprep.subr.mxu0 0.0
        %960 = vmatpush1.msra.mxu0 0.0
        %961 = vmatprep.subr.mxu0 0.0
        %962 = vmatpush1.msra.mxu0 0.0
        %963 = vmatprep.subr.mxu0 0.0
        %964 = vmatpush1.msra.mxu0 0.0
        %965 = vmatprep.subr.mxu0 0.0
        %966 = vmatpush1.msra.mxu0 0.0
        %967 = vmatprep.subr.mxu0 0.0
        %968 = vmatpush1.msra.mxu0 0.0
        %969 = vmatprep.subr.mxu0 0.0
        %970 = vmatpush1.msra.mxu0 0.0
        %971 = vmatprep.subr.mxu0 0.0
        %972 = vmatpush1.msra.mxu0 0.0
        %973 = vmatprep.subr.mxu0 0.0
        %974 = vmatpush1.msra.mxu0 0.0
        %975 = vmatprep.subr.mxu0 0.0
        %976 = vmatpush1.msra.mxu0 0.0
        %977 = vmatprep.subr.mxu0 0.0
        %978 = vmatpush1.msra.mxu0 0.0
        %979 = vmatprep.subr.mxu0 0.0
        %980 = vmatpush1.msra.mxu0 0.0
        %981 = vmatprep.subr.mxu0 0.0
        %982 = vmatpush1.msra.mxu0 0.0
        %983 = vmatprep.subr.mxu0 0.0
        %984 = vmatpush1.msra.mxu0 0.0
        %985 = vmatprep.mubr.f32.mxu0 0.0
        %986 = vmatmul.mubr.f32.gmra.mrb[0].mxu0 %v919
        %v987 = vpop.f32.mrb[0].mxu0
        %v988 = vadd.f32 %v916, %v987
        %v989 = vpop.f32.mrb[0].mxu0
        %v990 = vadd.f32 %v916, %v989
        %991 = vdwg.mxu0
        %v992 = vmul.f32 %v988, 0.5
        %v993 = vmul.f32 %v990, 0.5
        %v994 = vmul.f32 %v988, 0.70710677
        %v995 = vmul.f32 %v990, 0.70710677
        %vm996 = vcmp.ge.f32.partialorder %v994, 0.0
        %vm997 = vcmp.ge.f32.partialorder %v995, 0.0
        %v998 = vsel %vm996, 1.0, -1.0
        %v999 = vsel %vm997, 1.0, -1.0
        %v1000 = vand.u32 2147483647, %v994
        %v1001 = vand.u32 2147483647, %v995
        %v1002 = vmul.f32 %v1000, 0.3275911
        %v1003 = vmul.f32 %v1001, 0.3275911
        %v1004 = vadd.f32 %v1002, 1.0
        %v1005 = vadd.f32 %v1003, 1.0
        %v1006 = vrcp.pop %v1004
        %v1007 = vrcp.pop %v1005
        %v1008 = vmul.f32 %v1006, 1.0614054
        %v1009 = vmul.f32 %v1007, 1.0614054
        %v1010 = vadd.f32 %v1008, -1.4531521
        %v1011 = vadd.f32 %v1009, -1.4531521
        %v1012 = vmul.f32 %v1010, %v1006
        %v1013 = vmul.f32 %v1011, %v1007
        %v1014 = vadd.f32 %v1012, 1.4214138
        %v1015 = vadd.f32 %v1013, 1.4214138
        %v1016 = vmul.f32 %v1014, %v1006
        %v1017 = vmul.f32 %v1015, %v1007
        %v1018 = vadd.f32 %v1016, -0.28449672
        %v1019 = vadd.f32 %v1017, -0.28449672
        %v1020 = vmul.f32 %v1018, %v1006
        %v1021 = vmul.f32 %v1019, %v1007
        %v1022 = vadd.f32 %v1020, 0.2548296
        %v1023 = vadd.f32 %v1021, 0.2548296
        %v1024 = vmul.f32 %v1022, %v1006
        %v1025 = vmul.f32 %v1023, %v1007
        %v1026 = vsub.f32 0.0, %v1000
        %v1027 = vsub.f32 0.0, %v1001
        %v1028 = vmul.f32 %v1026, %v1000
        %v1029 = vmul.f32 %v1027, %v1001
        %v1030 = vmul.f32 %v1028, 1.442695
        %v1031 = vpow.pop %v1030
        %v1032 = vmul.f32 %v1029, 1.442695
        %v1033 = vpow.pop %v1032
        %v1034 = vmul.f32 %v1024, %v1031
        %v1035 = vmul.f32 %v1025, %v1033
        %v1036 = vsub.f32 1.0, %v1034
        %v1037 = vsub.f32 1.0, %v1035
        %v1038 = vmul.f32 %v998, %v1036
        %v1039 = vmul.f32 %v999, %v1037
        %v1040 = vadd.f32 %v1038, 1.0
        %v1041 = vadd.f32 %v1039, 1.0
        %v1042 = vmul.f32 %v992, %v1040
        %v1043 = vmul.f32 %v993, %v1041
        %1044 = vrot.lane.b32.xlu0 %v1042, 17
        %v1045 = vpop.permute.xlu0 %1044
        %1046 = vrot.lane.b32.xlu0 %v1043, 17
        %v1047 = vpop.permute.xlu0 %1046
        %v1048 = vsel %vm442, %v1045, %v1047
        %v1049 = vsel %vm442, %v1047, %v1045
        %v1050 = vsel %vm374, %v1049, 0.0
        %v1051 = vsel %vm375, %v1048, 0.0
        %1052 = vrot.lane.b32.xlu0 %v1042, 16
        %v1053 = vpop.permute.xlu0 %1052
        %1054 = vrot.lane.b32.xlu0 %v1043, 16
        %v1055 = vpop.permute.xlu0 %1054
        %v1056 = vsel %vm451, %v1053, %v1055
        %v1057 = vsel %vm451, %v1055, %v1053
        %v1058 = vsel %vm384, %v1057, 0.0
        %v1059 = vsel %vm385, %v1056, 0.0
        %1060 = vrot.lane.b32.xlu0 %v1042, 15
        %v1061 = vpop.permute.xlu0 %1060
        %1062 = vrot.lane.b32.xlu0 %v1043, 15
        %v1063 = vpop.permute.xlu0 %1062
        %v1064 = vsel %vm460, %v1061, %v1063
        %v1065 = vsel %vm460, %v1063, %v1061
        %v1066 = vsel %vm394, %v1065, 0.0
        %v1067 = vsel %vm395, %v1064, 0.0
        %1068 = vrot.lane.b32.xlu0 %v1042, 1
        %v1069 = vpop.permute.xlu0 %1068
        %1070 = vrot.lane.b32.xlu0 %v1043, 1
        %v1071 = vpop.permute.xlu0 %1070
        %v1072 = vsel %vm469, %v1069, %v1071
        %v1073 = vsel %vm469, %v1071, %v1069
        %v1074 = vsel %vm406, %v1073, 0.0
        %v1075 = vsel %vm407, %v1072, 0.0
        %v1076 = vsel %vm410, %v1042, 0.0
        %v1077 = vsel %vm411, %v1043, 0.0
        %1078 = vrot.lane.b32.xlu0 %v1042, 127
        %v1079 = vpop.permute.xlu0 %1078
        %1080 = vrot.lane.b32.xlu0 %v1043, 127
        %v1081 = vpop.permute.xlu0 %1080
        %v1082 = vsel %vm480, %v1079, %v1081
        %v1083 = vsel %vm480, %v1081, %v1079
        %v1084 = vsel %vm414, %v1082, 0.0
        %v1085 = vsel %vm415, %v1083, 0.0
        %1086 = vrot.lane.b32.xlu0 %v1042, 113
        %v1087 = vpop.permute.xlu0 %1086
        %1088 = vrot.lane.b32.xlu0 %v1043, 113
        %v1089 = vpop.permute.xlu0 %1088
        %v1090 = vsel %vm489, %v1087, %v1089
        %v1091 = vsel %vm489, %v1089, %v1087
        %v1092 = vsel %vm426, %v1090, 0.0
        %v1093 = vsel %vm427, %v1091, 0.0
        %1094 = vrot.lane.b32.xlu0 %v1042, 112
        %v1095 = vpop.permute.xlu0 %1094
        %1096 = vrot.lane.b32.xlu0 %v1043, 112
        %v1097 = vpop.permute.xlu0 %1096
        %v1098 = vsel %vm498, %v1095, %v1097
        %v1099 = vsel %vm498, %v1097, %v1095
        %v1100 = vsel %vm430, %v1098, 0.0
        %v1101 = vsel %vm431, %v1099, 0.0
        %1102 = vrot.lane.b32.xlu0 %v1042, 111
        %v1103 = vpop.permute.xlu0 %1102
        %1104 = vrot.lane.b32.xlu0 %v1043, 111
        %v1105 = vpop.permute.xlu0 %1104
        %v1106 = vsel %vm507, %v1103, %v1105
        %v1107 = vsel %vm507, %v1105, %v1103
        %v1108 = vsel %vm434, %v1106, 0.0
        %v1109 = vsel %vm435, %v1107, 0.0
        %v1110 = vld [vmem:[%s7] sm:$0xff]
        %v1111 = vld [vmem:[%s8] sm:$0xff]
        %1113 = vset.pattern.permute.xlu0 0
        %1114 = vperm.xlu0 %1113, %v1111
        %v1115 = vpop.permute.xlu0 %1114
        %v1118 = vsel %vm519, %v1110, 0
        %1120 = vmatprep.subr.mxu0 %v1051
        %1121 = vmatpush1.msra.mxu0 %v1050
        %1122 = vmatprep.subr.mxu0 %v1059
        %1123 = vmatpush1.msra.mxu0 %v1058
        %1124 = vmatprep.subr.mxu0 %v1067
        %1125 = vmatpush1.msra.mxu0 %v1066
        %1126 = vmatprep.subr.mxu0 %v1075
        %1127 = vmatpush1.msra.mxu0 %v1074
        %1128 = vmatprep.subr.mxu0 %v1077
        %1129 = vmatpush1.msra.mxu0 %v1076
        %1130 = vmatprep.subr.mxu0 %v1085
        %1131 = vmatpush1.msra.mxu0 %v1084
        %1132 = vmatprep.subr.mxu0 %v1093
        %1133 = vmatpush1.msra.mxu0 %v1092
        %1134 = vmatprep.subr.mxu0 %v1101
        %1135 = vmatpush1.msra.mxu0 %v1100
        %1136 = vmatprep.subr.mxu0 %v1109
        %1137 = vmatpush1.msra.mxu0 %v1108
        %1138 = vmatprep.subr.mxu0 0.0
        %1139 = vmatpush1.msra.mxu0 0.0
        %1140 = vmatprep.subr.mxu0 0.0
        %1141 = vmatpush1.msra.mxu0 0.0
        %1142 = vmatprep.subr.mxu0 0.0
        %1143 = vmatpush1.msra.mxu0 0.0
        %1144 = vmatprep.subr.mxu0 0.0
        %1145 = vmatpush1.msra.mxu0 0.0
        %1146 = vmatprep.subr.mxu0 0.0
        %1147 = vmatpush1.msra.mxu0 0.0
        %1148 = vmatprep.subr.mxu0 0.0
        %1149 = vmatpush1.msra.mxu0 0.0
        %1150 = vmatprep.subr.mxu0 0.0
        %1151 = vmatpush1.msra.mxu0 0.0
        %1152 = vmatprep.subr.mxu0 0.0
        %1153 = vmatpush1.msra.mxu0 0.0
        %1154 = vmatprep.subr.mxu0 0.0
        %1155 = vmatpush1.msra.mxu0 0.0
        %1156 = vmatprep.subr.mxu0 0.0
        %1157 = vmatpush1.msra.mxu0 0.0
        %1158 = vmatprep.subr.mxu0 0.0
        %1159 = vmatpush1.msra.mxu0 0.0
        %1160 = vmatprep.subr.mxu0 0.0
        %1161 = vmatpush1.msra.mxu0 0.0
        %1162 = vmatprep.subr.mxu0 0.0
        %1163 = vmatpush1.msra.mxu0 0.0
        %1164 = vmatprep.subr.mxu0 0.0
        %1165 = vmatpush1.msra.mxu0 0.0
        %1166 = vmatprep.subr.mxu0 0.0
        %1167 = vmatpush1.msra.mxu0 0.0
        %1168 = vmatprep.subr.mxu0 0.0
        %1169 = vmatpush1.msra.mxu0 0.0
        %1170 = vmatprep.subr.mxu0 0.0
        %1171 = vmatpush1.msra.mxu0 0.0
        %1172 = vmatprep.subr.mxu0 0.0
        %1173 = vmatpush1.msra.mxu0 0.0
        %1174 = vmatprep.subr.mxu0 0.0
        %1175 = vmatpush1.msra.mxu0 0.0
        %1176 = vmatprep.subr.mxu0 0.0
        %1177 = vmatpush1.msra.mxu0 0.0
        %1178 = vmatprep.subr.mxu0 0.0
        %1179 = vmatpush1.msra.mxu0 0.0
        %1180 = vmatprep.subr.mxu0 0.0
        %1181 = vmatpush1.msra.mxu0 0.0
        %1182 = vmatprep.subr.mxu0 0.0
        %1183 = vmatpush1.msra.mxu0 0.0
        %1184 = vmatprep.mubr.f32.mxu0 0.0
        %1185 = vmatmul.mubr.f32.gmra.mrb[0].mxu0 %v1118
        %v1186 = vpop.f32.mrb[0].mxu0
        %v1187 = vadd.f32 %v1115, %v1186
        %v1188 = vpop.f32.mrb[0].mxu0
        %v1189 = vadd.f32 %v1115, %v1188
        %1190 = vdwg.mxu0
        %v1191 = vtanh.pop %v1187
        %v1192 = vtanh.pop %v1189
        %v1193 = vmul.f32 %v1191, 0.5
        %v1194 = vmul.f32 %v1192, 0.5
        %1195 = vst [vmem:[%s338] sm:$0xff] %v1193
        %1196 = vst [vmem:[%s338 + $0x8] sm:$0xff] %v1194
        %s1197 = sand.u32 %s226, 1
        %s1198 = scalar_lea.sflag [#allocation4], %s1197
        %s1199 = sand.u32 %s226, 1
        %s1200 = smul.addr %s1199, 16
        %s1201 = scalar_lea.vmem [#allocation5], %s1200
        // Predicated region
        $region61: #{tpu_custom_call.1} parent=55 // pred_check
          %p1202 = pneg %p236
        $region62: #{tpu_custom_call.1} parent=55 // pred_check_branch
          %1204 = sbr.rel (%p1202) target = $region64
        $region63: #{tpu_custom_call.1} parent=55 // pred_region
          %s1206 = ssub.s32 256, 256
          %1207 = vsyncadd %s1198, %s1206
          %s1208 = smul.addr %s24, 2
          %s1209 = smul.addr %s1208, 128
          %s1210 = scalar_lea.hbm %s9, %s1209
          %s1212 = sshll.u32 %s1201, 4
          %s1213 = int_to_ptr.vmem [resolvable:$true] %s1212
          %1215 = dma.vmem_to_hbm [thread:$0]  %s1213, 256, %s1210, %s1198
        $region64: #{tpu_custom_call.1} parent=55 // pred_fallthru
          _
      $region56: #{tpu_custom_call.1} parent=5 // pred_fallthru
        _
      %p1216 = scmp.le.s32.totalorder 2, %s19
      // Predicated region
      $region65: #{tpu_custom_call.1} parent=5 // pred_check
        %p1217 = pneg %p1216
      $region66: #{tpu_custom_call.1} parent=5 // pred_check_branch
        %1219 = sbr.rel (%p1217) target = $region68
      $region67: #{tpu_custom_call.1} parent=5 // pred_region
        %s1220 = ssub.s32 %s19, 2
        // Predicated region
        $region69: #{tpu_custom_call.1} parent=67 // pred_check
          %p1221 = pneg %p242
        $region70: #{tpu_custom_call.1} parent=67 // pred_check_branch
          %1223 = sbr.rel (%p1221) target = $region72
        $region71: #{tpu_custom_call.1} parent=67 // pred_region
          %s1224 = sand.u32 %s227, 1
          %s1225 = scalar_lea.sflag [#allocation4], %s1224
          %s1226 = sand.u32 %s227, 1
          %s1227 = smul.addr %s1226, 16
          %s1228 = scalar_lea.vmem [#allocation5], %s1227
          %1229 = dma.done %s1225, 256
        $region72: #{tpu_custom_call.1} parent=67 // pred_fallthru
          _
      $region68: #{tpu_custom_call.1} parent=5 // pred_fallthru
        _
    $region6: #{tpu_custom_call.1} parent=1 // loop_footer
      %s23 = sadd.s32 1, %s19
    $region7: #{tpu_custom_call.1} parent=1 // loop_footer_branch
      %18 = sbr.rel target = $region3
    $region8: #{tpu_custom_call.1} parent=1 // loop_exit
      _
    %1230 = vsyncpa [#allocation3], 1
    %s1231 = scalar_lea.sflag [#allocation3], 1
    %1232 = vsyncpa %s1231, 1
    %1233 = vsyncpa [#allocation4], 1
    %s1234 = scalar_lea.sflag [#allocation4], 1
    %1235 = vsyncpa %s1234, 1

</llo_original>
